<compile_context>
chip_gen: v7x
topology: tpu7x:2x2x1
jax: 0.10.0
libtpu: 0.0.40
codegen_flags: <defaults>
</compile_context>

<pallas_src>
from collections import OrderedDict
from functools import partial

import numpy as np

import jax
import jax.numpy as jnp
from jax.experimental import pallas as pl
from jax.experimental.pallas import tpu as pltpu

NSTAT = 13                     # number of accumulated statistics
EPS = 1e-6
_LANE = 128
_ROW_ALIGN = 32                # satisfies f32 (8), bf16 (16) and int8 (32) sublane packing
_BYTES_PER_ELEM = 5 * 4 + 1    # 5 f32 streams + 1 int8 mask stream


def _round_up(x, m):
    return (x + m - 1) // m * m


def _pick_tile_rows(w_pad, rows_per_core_hint):
    """Row-tile size: big enough to amortize the ~0.35us per-grid-step overhead,
    small enough that 6 double-buffered input tiles stay well inside VMEM on
    every generation (v5e 16 MiB scoped default .. v7x 64 MiB physical)."""
    bytes_per_row = _BYTES_PER_ELEM * w_pad
    target = (6 << 20) // bytes_per_row            # ~6 MiB of input per grid step
    vmem_cap = (36 << 20) // (2 * bytes_per_row)   # keep double-buffering < ~36 MiB
    tr = min(1024, max(_ROW_ALIGN, min(target, vmem_cap)))
    tr = max(_ROW_ALIGN, (tr // _ROW_ALIGN) * _ROW_ALIGN)
    tr = min(tr, _round_up(max(rows_per_core_hint, 1), _ROW_ALIGN))
    return tr


def criterion_stats_kernel(disp_ref, gtr_ref, plow_ref, pred_ref, occp_ref,
                           occm_ref, out_ref, *, px_threshold, max_disp):
    """Accumulate vreg-shaped partial sums of every masked reduction.

    out_ref: f32[NSTAT, 8, W] resident VMEM accumulator (one (8, W) slab per
    statistic).  The final scalar reduction happens in the wrapper (one tiny
    XLA reduce), so the per-tile hot loop is pure VPU work: no cross-lane XLU
    reductions and no SMEM read-modify-write on the critical path.
      0 n_valid      1 rr_sum       2 l1_raw_sum   3 l1_sum
      4 occ_be_occ   5 occ_be_noc   6 n_occ        7 err_px_count
      8 epe_sum      9 inter_occ   10 union_occ   11 inter_noc
     12 union_noc
    """
    @pl.when(pl.program_id(1) == 0)
    def _init():
        out_ref[...] = jnp.zeros_like(out_ref)

    tr, w = disp_ref.shape
    g = tr // 8

    disp = disp_ref[...]
    if max_disp < 0:                                   # validation_max_disp == -1
        valid = (disp > 0.0).astype(jnp.float32)       # ~invalid_mask
    else:
        valid = jnp.logical_and(disp > 0.0, disp < max_disp).astype(jnp.float32)

    gtr = gtr_ref[...]
    pred_low = plow_ref[...]
    pred = pred_ref[...]
    occp = occp_ref[...]
    occm = occm_ref[...].astype(jnp.float32)           # int8 {0,1} -> f32

    rr = -jnp.log(gtr + EPS)

    d_low = pred_low - disp
    ad_low = jnp.abs(d_low)
    l1_raw = jnp.where(ad_low < 1.0, 0.5 * ad_low * ad_low, ad_low - 0.5)

    abs_err = jnp.abs(pred - disp)                     # shared by l1 / epe / px-error
    l1 = jnp.where(abs_err < 1.0, 0.5 * abs_err * abs_err, abs_err - 0.5)

    be_occ = -jnp.log(occp + EPS)
    be_noc = -jnp.log((1.0 - occp) + EPS)

    pred_mask = (occp > 0.5).astype(jnp.float32)
    npred_mask = 1.0 - pred_mask
    err_gt_thr = (abs_err > px_threshold).astype(jnp.float32)

    stats = (
        valid,                                         # 0 n_valid
        valid * rr,                                    # 1 rr_sum
        valid * l1_raw,                                # 2 l1_raw_sum
        valid * l1,                                    # 3 l1_sum
        occm * be_occ,                                 # 4 occ_be on occluded px
        valid * be_noc,                                # 5 occ_be on valid px
        occm,                                          # 6 n_occ
        valid * err_gt_thr,                            # 7 px-error count
        valid * abs_err,                               # 8 epe_sum
        pred_mask * occm,                              # 9 inter_occ
        jnp.maximum(pred_mask * valid, occm),          # 10 union_occ
        npred_mask * valid,                            # 11 inter_noc
        jnp.maximum(npred_mask * occm, valid),         # 12 union_noc
    )
    # Fold the tile's rows in groups of 8: (tr, w) -> (tr//8, 8, w) is a pure
    # row-major regroup (sublane/lane mapping unchanged), and the axis-0 sum
    # is vreg-to-vreg VPU adds only.
    for i, e in enumerate(stats):
        out_ref[i] = out_ref[i] + jnp.sum(e.reshape(g, 8, w), axis=0)


def criterion_stats(disp, gt_response, pred_low, pred, occ_pred, occ_mask,
                    *, px_threshold, max_disp, tile_rows=None, n_cores=2):
    """All inputs are rank-2 [rows, width]; returns f32[NSTAT] masked sums/counts."""
    R, W = disp.shape
    W_pad = _round_up(W, _LANE)
    rows_per_core_hint = -(-R // n_cores)
    if tile_rows is None:
        tile_rows = _pick_tile_rows(W_pad, rows_per_core_hint)
    tile_rows = max(_ROW_ALIGN, _round_up(tile_rows, _ROW_ALIGN))
    rows_per_core = _round_up(max(rows_per_core_hint, 1), tile_rows)
    R_pad = n_cores * rows_per_core
    tiles_per_core = rows_per_core // tile_rows

    def pad2(x):
        if x.shape == (R_pad, W_pad):
            return x
        # zero padding contributes exactly zero to every statistic
        # (disp=0 -> invalid, occ_mask=0, every term is masked by one of them)
        return jnp.pad(x, ((0, R_pad - x.shape[0]), (0, W_pad - x.shape[1])))

    f32 = lambda x: pad2(jnp.asarray(x, jnp.float32))
    args = (f32(disp), f32(gt_response), f32(pred_low), f32(pred), f32(occ_pred),
            pad2(jnp.asarray(occ_mask, jnp.int8)))

    in_spec = pl.BlockSpec((tile_rows, W_pad),
                           lambda c, i: (c * tiles_per_core + i, 0))
    out_spec = pl.BlockSpec((None, NSTAT, 8, W_pad),
                            lambda c, i: (c, 0, 0, 0))

    tile_bytes = _BYTES_PER_ELEM * tile_rows * W_pad
    out_bytes = n_cores * NSTAT * 8 * W_pad * 4
    vmem_limit = int(min(48 << 20, max(32 << 20, 2 * tile_bytes + out_bytes + (8 << 20))))

    out = pl.pallas_call(
        partial(criterion_stats_kernel,
                px_threshold=float(px_threshold), max_disp=float(max_disp)),
        out_shape=jax.ShapeDtypeStruct((n_cores, NSTAT, 8, W_pad), jnp.float32),
        grid_spec=pltpu.PrefetchScalarGridSpec(
            num_scalar_prefetch=0,
            grid=(n_cores, tiles_per_core),
            in_specs=[in_spec] * 6,
            out_specs=out_spec,
        ),
        compiler_params=pltpu.CompilerParams(
            dimension_semantics=("parallel", "arbitrary"),
            vmem_limit_bytes=vmem_limit),
        cost_estimate=pl.CostEstimate(
            flops=50 * R_pad * W_pad,
            transcendentals=3 * R_pad * W_pad,
            bytes_accessed=_BYTES_PER_ELEM * R_pad * W_pad + out_bytes),
    )(*args)

    # tiny final reduction (2 * NSTAT * 8 * W_pad floats) done by XLA
    return out.sum(axis=(0, 2, 3))


class CriterionPallas:
    """JAX/Pallas port of openstereo sttr Criterion (forward only)."""

    def __init__(self, threshold: int = 3, validation_max_disp: int = -1,
                 loss_weight: dict | None = None):
        if loss_weight is None:
            # deterministic synthetic weights (module __init__ takes them as input)
            loss_weight = {"rr": 1.0, "l1_raw": 1.0, "l1": 1.0, "occ_be": 1.0}
        self.px_threshold = threshold
        self.validation_max_disp = validation_max_disp
        self.weights = loss_weight

    def __call__(self, inputs: dict, outputs: dict):
        disp = inputs["disp"]            # [N, H, W] float
        occ_mask = inputs["occ_mask"]    # [N, H, W] bool
        N, H, W = disp.shape

        def flat(x):
            return jnp.asarray(x).reshape(N * H, W)

        # TODO(synk): sampled_cols / sampled_rows subsampling and the optional
        # gt_response_occ_left / gt_response_occ_right concat branches are not
        # exercised here (inputs.sampled_* is None, outputs lack those keys).
        stats = criterion_stats(
            flat(disp),
            flat(outputs["gt_response"]),
            flat(outputs["disp_pred_low_res"]),
            flat(outputs["disp_pred"]),
            flat(outputs["occ_pred"]),
            flat(occ_mask),
            px_threshold=self.px_threshold,
            max_disp=self.validation_max_disp,
        )

        n_valid = stats[0]
        loss = OrderedDict()
        loss["rr"] = stats[1] / n_valid
        loss["l1_raw"] = stats[2] / n_valid
        loss["l1"] = stats[3] / n_valid
        loss["occ_be"] = (stats[4] + stats[5]) / (stats[6] + n_valid)

        agg = 0.0
        for key in ("rr", "l1_raw", "l1", "occ_be"):
            agg = agg + loss[key] * self.weights[key]
        loss["aggregated"] = agg

        loss["error_px"] = stats[7].astype(jnp.int32)    # exact up to 2^24 px
        loss["total_px"] = n_valid.astype(jnp.int32)
        loss["epe"] = stats[8] / n_valid
        loss["iou"] = (stats[9] + stats[11]) / (stats[10] + stats[12])
        return loss


def _reference(inputs, outputs, threshold, max_disp, weights):
    """Pure-jnp replica of the PyTorch module (for correctness checking)."""
    disp = jnp.asarray(inputs["disp"], jnp.float32)
    occ = jnp.asarray(inputs["occ_mask"], bool)
    if max_disp == -1:
        invalid = disp <= 0.0
    else:
        invalid = (disp <= 0.0) | (disp >= max_disp)
    valid = ~invalid
    gtr = jnp.asarray(outputs["gt_response"], jnp.float32)
    plow = jnp.asarray(outputs["disp_pred_low_res"], jnp.float32)
    pred = jnp.asarray(outputs["disp_pred"], jnp.float32)
    occp = jnp.asarray(outputs["occ_pred"], jnp.float32)
    eps = 1e-6
    nv = jnp.sum(valid)

    def mmean(x, m):
        return jnp.sum(jnp.where(m, x, 0.0)) / jnp.sum(m)

    def sl1(d):
        ad = jnp.abs(d)
        return jnp.where(ad < 1.0, 0.5 * ad * ad, ad - 0.5)

    loss = {}
    loss["rr"] = mmean(-jnp.log(gtr + eps), valid)
    loss["l1_raw"] = mmean(sl1(plow - disp), valid)
    loss["l1"] = mmean(sl1(pred - disp), valid)
    occ_sum = jnp.sum(jnp.where(occ, -jnp.log(occp + eps), 0.0))
    noc_sum = jnp.sum(jnp.where(valid, -jnp.log(1.0 - occp + eps), 0.0))
    loss["occ_be"] = (occ_sum + noc_sum) / (jnp.sum(occ) + nv)
    loss["aggregated"] = sum(loss[k] * weights[k] for k in ("rr", "l1_raw", "l1", "occ_be"))
    abs_err = jnp.abs(pred - disp)
    loss["error_px"] = jnp.sum(jnp.where(valid, abs_err > threshold, False))
    loss["total_px"] = nv
    loss["epe"] = mmean(abs_err, valid)
    pm = occp > 0.5
    inter_occ = jnp.sum(pm & occ)
    union_occ = jnp.sum((pm & valid) | occ)
    inter_noc = jnp.sum(~pm & valid)
    union_noc = jnp.sum((~pm & occ) | valid)
    loss["iou"] = (inter_occ + inter_noc) / (union_occ + union_noc)
    return loss


if __name__ == "__main__":
    key = jax.random.PRNGKey(0)
    k1, k2, k3, k4, k5, k6 = jax.random.split(key, 6)

    N, H, W = 2, 16, 128   # small shapes: 32 rows x 128 lanes

    # ground-truth disparity, some pixels <= 0 -> invalid
    disp = jax.random.uniform(k1, (N, H, W), jnp.float32, -2.0, 12.0)
    occ_mask = jax.random.bernoulli(k2, 0.2, (N, H, W))

    outputs = {
        "gt_response": jax.random.uniform(k3, (N, H, W), jnp.float32, 0.01, 1.0),
        "disp_pred_low_res": disp + jax.random.normal(k4, (N, H, W), jnp.float32),
        "disp_pred": disp + 2.0 * jax.random.normal(k5, (N, H, W), jnp.float32),
        "occ_pred": jax.random.uniform(k6, (N, H, W), jnp.float32, 0.01, 0.99),
    }
    inputs = {"disp": disp, "occ_mask": occ_mask}

    criterion = CriterionPallas(threshold=3, validation_max_disp=-1)
    loss_dict = criterion(inputs, outputs)
    loss_dict = jax.tree_util.tree_map(jax.block_until_ready, loss_dict)

    ref = _reference(inputs, outputs, 3, -1, criterion.weights)
    for k in ("rr", "l1_raw", "l1", "occ_be", "aggregated", "epe", "iou"):
        np.testing.assert_allclose(np.asarray(loss_dict[k]), np.asarray(ref[k]),
                                   rtol=2e-3, atol=2e-3)
    assert int(loss_dict["error_px"]) == int(ref["error_px"])
    assert int(loss_dict["total_px"]) == int(ref["total_px"])

    print("KERNEL_OK")
</pallas_src>

<mosaic_0001>
module attributes {stable_mosaic.version = 11 : i64} {
  func.func @criterion_stats_kernel(%arg0: i32, %arg1: i32, %arg2: memref<32x128xf32, #tpu.memory_space<vmem>>, %arg3: memref<32x128xf32, #tpu.memory_space<vmem>>, %arg4: memref<32x128xf32, #tpu.memory_space<vmem>>, %arg5: memref<32x128xf32, #tpu.memory_space<vmem>>, %arg6: memref<32x128xf32, #tpu.memory_space<vmem>>, %arg7: memref<32x128xi8, #tpu.memory_space<vmem>>, %arg8: memref<1x13x8x128xf32, #tpu.memory_space<vmem>>) attributes {dimension_semantics = [#tpu.dimension_semantics<parallel>, #tpu.dimension_semantics<arbitrary>], iteration_bounds = array<i64: 2, 1>, scalar_prefetch = 0 : i64, scratch_operands = 0 : i64, tpu.core_type = #tpu.core_type<tc>, window_params = [{transform_indices = @transform_0, window_bounds = array<i64: 32, 128>}, {transform_indices = @transform_1, window_bounds = array<i64: 32, 128>}, {transform_indices = @transform_2, window_bounds = array<i64: 32, 128>}, {transform_indices = @transform_3, window_bounds = array<i64: 32, 128>}, {transform_indices = @transform_4, window_bounds = array<i64: 32, 128>}, {transform_indices = @transform_5, window_bounds = array<i64: 32, 128>}, {transform_indices = @transform_6, window_bounds = array<i64: 1, 13, 8, 128>}]} {
    %c0_i32 = arith.constant 0 : i32
    %0 = arith.cmpi eq, %arg1, %c0_i32 : i32
    %1 = arith.extui %0 : i1 to i32
    %c0_i32_0 = arith.constant 0 : i32
    %2 = arith.cmpi ne, %1, %c0_i32_0 : i32
    scf.if %2 {
      %cst_133 = arith.constant 0.000000e+00 : f32
      %178 = vector.broadcast %cst_133 : f32 to vector<13x8x128xf32>
      %c0_134 = arith.constant 0 : index
      %c0_135 = arith.constant 0 : index
      %c0_136 = arith.constant 0 : index
      %c0_137 = arith.constant 0 : index
      %179 = vector.load %arg8[%c0_134, %c0_135, %c0_136, %c0_137] : memref<1x13x8x128xf32, #tpu.memory_space<vmem>>, vector<1x13x8x128xf32>
      %180 = vector.shape_cast %179 : vector<1x13x8x128xf32> to vector<13x8x128xf32>
      %181 = vector.shape_cast %178 : vector<13x8x128xf32> to vector<1x13x8x128xf32>
      tpu.vector_store %arg8[%c0_134, %c0_135, %c0_136, %c0_137], %181 {strides = array<i32>} : memref<1x13x8x128xf32, #tpu.memory_space<vmem>>, vector<1x13x8x128xf32>,
    } else {
    }
    %c0 = arith.constant 0 : index
    %c0_1 = arith.constant 0 : index
    %3 = vector.load %arg2[%c0, %c0_1] : memref<32x128xf32, #tpu.memory_space<vmem>>, vector<32x128xf32>
    %cst = arith.constant 0.000000e+00 : f32
    %4 = vector.broadcast %cst : f32 to vector<32x128xf32>
    %5 = arith.cmpf ogt, %3, %4 : vector<32x128xf32>
    %6 = arith.extui %5 : vector<32x128xi1> to vector<32x128xi32>
    %7 = arith.sitofp %6 : vector<32x128xi32> to vector<32x128xf32>
    %c0_2 = arith.constant 0 : index
    %c0_3 = arith.constant 0 : index
    %8 = vector.load %arg3[%c0_2, %c0_3] : memref<32x128xf32, #tpu.memory_space<vmem>>, vector<32x128xf32>
    %c0_4 = arith.constant 0 : index
    %c0_5 = arith.constant 0 : index
    %9 = vector.load %arg4[%c0_4, %c0_5] : memref<32x128xf32, #tpu.memory_space<vmem>>, vector<32x128xf32>
    %c0_6 = arith.constant 0 : index
    %c0_7 = arith.constant 0 : index
    %10 = vector.load %arg5[%c0_6, %c0_7] : memref<32x128xf32, #tpu.memory_space<vmem>>, vector<32x128xf32>
    %c0_8 = arith.constant 0 : index
    %c0_9 = arith.constant 0 : index
    %11 = vector.load %arg6[%c0_8, %c0_9] : memref<32x128xf32, #tpu.memory_space<vmem>>, vector<32x128xf32>
    %c0_10 = arith.constant 0 : index
    %c0_11 = arith.constant 0 : index
    %12 = vector.load %arg7[%c0_10, %c0_11] : memref<32x128xi8, #tpu.memory_space<vmem>>, vector<32x128xi8>
    %13 = arith.sitofp %12 : vector<32x128xi8> to vector<32x128xf32>
    %cst_12 = arith.constant 9.99999997E-7 : f32
    %14 = vector.broadcast %cst_12 : f32 to vector<32x128xf32>
    %15 = arith.addf %8, %14 : vector<32x128xf32>
    %16 = math.log %15 : vector<32x128xf32>
    %cst_13 = arith.constant 0.000000e+00 : f32
    %17 = vector.broadcast %cst_13 : f32 to vector<32x128xf32>
    %18 = arith.subf %17, %16 : vector<32x128xf32>
    %19 = arith.subf %9, %3 : vector<32x128xf32>
    %20 = math.absf %19 : vector<32x128xf32>
    %cst_14 = arith.constant 1.000000e+00 : f32
    %21 = vector.broadcast %cst_14 : f32 to vector<32x128xf32>
    %22 = arith.cmpf olt, %20, %21 : vector<32x128xf32>
    %cst_15 = arith.constant 5.000000e-01 : f32
    %23 = vector.broadcast %cst_15 : f32 to vector<32x128xf32>
    %24 = arith.mulf %23, %20 : vector<32x128xf32>
    %25 = arith.mulf %24, %20 : vector<32x128xf32>
    %cst_16 = arith.constant 5.000000e-01 : f32
    %26 = vector.broadcast %cst_16 : f32 to vector<32x128xf32>
    %27 = arith.subf %20, %26 : vector<32x128xf32>
    %28 = arith.select %22, %25, %27 : vector<32x128xi1>, vector<32x128xf32>
    %29 = arith.subf %10, %3 : vector<32x128xf32>
    %30 = math.absf %29 : vector<32x128xf32>
    %cst_17 = arith.constant 1.000000e+00 : f32
    %31 = vector.broadcast %cst_17 : f32 to vector<32x128xf32>
    %32 = arith.cmpf olt, %30, %31 : vector<32x128xf32>
    %cst_18 = arith.constant 5.000000e-01 : f32
    %33 = vector.broadcast %cst_18 : f32 to vector<32x128xf32>
    %34 = arith.mulf %33, %30 : vector<32x128xf32>
    %35 = arith.mulf %34, %30 : vector<32x128xf32>
    %cst_19 = arith.constant 5.000000e-01 : f32
    %36 = vector.broadcast %cst_19 : f32 to vector<32x128xf32>
    %37 = arith.subf %30, %36 : vector<32x128xf32>
    %38 = arith.select %32, %35, %37 : vector<32x128xi1>, vector<32x128xf32>
    %cst_20 = arith.constant 9.99999997E-7 : f32
    %39 = vector.broadcast %cst_20 : f32 to vector<32x128xf32>
    %40 = arith.addf %11, %39 : vector<32x128xf32>
    %41 = math.log %40 : vector<32x128xf32>
    %cst_21 = arith.constant 0.000000e+00 : f32
    %42 = vector.broadcast %cst_21 : f32 to vector<32x128xf32>
    %43 = arith.subf %42, %41 : vector<32x128xf32>
    %cst_22 = arith.constant 1.000000e+00 : f32
    %44 = vector.broadcast %cst_22 : f32 to vector<32x128xf32>
    %45 = arith.subf %44, %11 : vector<32x128xf32>
    %cst_23 = arith.constant 9.99999997E-7 : f32
    %46 = vector.broadcast %cst_23 : f32 to vector<32x128xf32>
    %47 = arith.addf %45, %46 : vector<32x128xf32>
    %48 = math.log %47 : vector<32x128xf32>
    %cst_24 = arith.constant 0.000000e+00 : f32
    %49 = vector.broadcast %cst_24 : f32 to vector<32x128xf32>
    %50 = arith.subf %49, %48 : vector<32x128xf32>
    %cst_25 = arith.constant 5.000000e-01 : f32
    %51 = vector.broadcast %cst_25 : f32 to vector<32x128xf32>
    %52 = arith.cmpf ogt, %11, %51 : vector<32x128xf32>
    %53 = arith.extui %52 : vector<32x128xi1> to vector<32x128xi32>
    %54 = arith.sitofp %53 : vector<32x128xi32> to vector<32x128xf32>
    %cst_26 = arith.constant 1.000000e+00 : f32
    %55 = vector.broadcast %cst_26 : f32 to vector<32x128xf32>
    %56 = arith.subf %55, %54 : vector<32x128xf32>
    %cst_27 = arith.constant 3.000000e+00 : f32
    %57 = vector.broadcast %cst_27 : f32 to vector<32x128xf32>
    %58 = arith.cmpf ogt, %30, %57 : vector<32x128xf32>
    %59 = arith.extui %58 : vector<32x128xi1> to vector<32x128xi32>
    %60 = arith.sitofp %59 : vector<32x128xi32> to vector<32x128xf32>
    %61 = arith.mulf %7, %18 : vector<32x128xf32>
    %62 = arith.mulf %7, %28 : vector<32x128xf32>
    %63 = arith.mulf %7, %38 : vector<32x128xf32>
    %64 = arith.mulf %13, %43 : vector<32x128xf32>
    %65 = arith.mulf %7, %50 : vector<32x128xf32>
    %66 = arith.mulf %7, %60 : vector<32x128xf32>
    %67 = arith.mulf %7, %30 : vector<32x128xf32>
    %68 = arith.mulf %54, %13 : vector<32x128xf32>
    %69 = arith.mulf %54, %7 : vector<32x128xf32>
    %70 = arith.maximumf %69, %13 : vector<32x128xf32>
    %71 = arith.mulf %56, %7 : vector<32x128xf32>
    %72 = arith.mulf %56, %13 : vector<32x128xf32>
    %73 = arith.maximumf %72, %7 : vector<32x128xf32>
    %c0_28 = arith.constant 0 : index
    %c0_29 = arith.constant 0 : index
    %c0_30 = arith.constant 0 : index
    %c0_31 = arith.constant 0 : index
    %74 = vector.load %arg8[%c0_28, %c0_29, %c0_30, %c0_31] : memref<1x13x8x128xf32, #tpu.memory_space<vmem>>, vector<1x1x8x128xf32>
    %75 = vector.shape_cast %74 : vector<1x1x8x128xf32> to vector<8x128xf32>
    %76 = vector.shape_cast %7 : vector<32x128xf32> to vector<4x8x128xf32>
    %cst_32 = arith.constant dense<0.000000e+00> : vector<8x128xf32>
    %77 = vector.multi_reduction <add>, %76, %cst_32 [0] : vector<4x8x128xf32> to vector<8x128xf32>
    %78 = arith.addf %75, %77 : vector<8x128xf32>
    %c0_33 = arith.constant 0 : index
    %c0_34 = arith.constant 0 : index
    %c0_35 = arith.constant 0 : index
    %c0_36 = arith.constant 0 : index
    %79 = vector.load %arg8[%c0_33, %c0_34, %c0_35, %c0_36] : memref<1x13x8x128xf32, #tpu.memory_space<vmem>>, vector<1x1x8x128xf32>
    %80 = vector.shape_cast %79 : vector<1x1x8x128xf32> to vector<8x128xf32>
    %81 = vector.shape_cast %78 : vector<8x128xf32> to vector<1x1x8x128xf32>
    tpu.vector_store %arg8[%c0_33, %c0_34, %c0_35, %c0_36], %81 {strides = array<i32>} : memref<1x13x8x128xf32, #tpu.memory_space<vmem>>, vector<1x1x8x128xf32>,
    %c0_37 = arith.constant 0 : index
    %c1 = arith.constant 1 : index
    %c0_38 = arith.constant 0 : index
    %c0_39 = arith.constant 0 : index
    %82 = vector.load %arg8[%c0_37, %c1, %c0_38, %c0_39] : memref<1x13x8x128xf32, #tpu.memory_space<vmem>>, vector<1x1x8x128xf32>
    %83 = vector.shape_cast %82 : vector<1x1x8x128xf32> to vector<8x128xf32>
    %84 = vector.shape_cast %61 : vector<32x128xf32> to vector<4x8x128xf32>
    %cst_40 = arith.constant dense<0.000000e+00> : vector<8x128xf32>
    %85 = vector.multi_reduction <add>, %84, %cst_40 [0] : vector<4x8x128xf32> to vector<8x128xf32>
    %86 = arith.addf %83, %85 : vector<8x128xf32>
    %c0_41 = arith.constant 0 : index
    %c1_42 = arith.constant 1 : index
    %c0_43 = arith.constant 0 : index
    %c0_44 = arith.constant 0 : index
    %87 = vector.load %arg8[%c0_41, %c1_42, %c0_43, %c0_44] : memref<1x13x8x128xf32, #tpu.memory_space<vmem>>, vector<1x1x8x128xf32>
    %88 = vector.shape_cast %87 : vector<1x1x8x128xf32> to vector<8x128xf32>
    %89 = vector.shape_cast %86 : vector<8x128xf32> to vector<1x1x8x128xf32>
    tpu.vector_store %arg8[%c0_41, %c1_42, %c0_43, %c0_44], %89 {strides = array<i32>} : memref<1x13x8x128xf32, #tpu.memory_space<vmem>>, vector<1x1x8x128xf32>,
    %c0_45 = arith.constant 0 : index
    %c2 = arith.constant 2 : index
    %c0_46 = arith.constant 0 : index
    %c0_47 = arith.constant 0 : index
    %90 = vector.load %arg8[%c0_45, %c2, %c0_46, %c0_47] : memref<1x13x8x128xf32, #tpu.memory_space<vmem>>, vector<1x1x8x128xf32>
    %91 = vector.shape_cast %90 : vector<1x1x8x128xf32> to vector<8x128xf32>
    %92 = vector.shape_cast %62 : vector<32x128xf32> to vector<4x8x128xf32>
    %cst_48 = arith.constant dense<0.000000e+00> : vector<8x128xf32>
    %93 = vector.multi_reduction <add>, %92, %cst_48 [0] : vector<4x8x128xf32> to vector<8x128xf32>
    %94 = arith.addf %91, %93 : vector<8x128xf32>
    %c0_49 = arith.constant 0 : index
    %c2_50 = arith.constant 2 : index
    %c0_51 = arith.constant 0 : index
    %c0_52 = arith.constant 0 : index
    %95 = vector.load %arg8[%c0_49, %c2_50, %c0_51, %c0_52] : memref<1x13x8x128xf32, #tpu.memory_space<vmem>>, vector<1x1x8x128xf32>
    %96 = vector.shape_cast %95 : vector<1x1x8x128xf32> to vector<8x128xf32>
    %97 = vector.shape_cast %94 : vector<8x128xf32> to vector<1x1x8x128xf32>
    tpu.vector_store %arg8[%c0_49, %c2_50, %c0_51, %c0_52], %97 {strides = array<i32>} : memref<1x13x8x128xf32, #tpu.memory_space<vmem>>, vector<1x1x8x128xf32>,
    %c0_53 = arith.constant 0 : index
    %c3 = arith.constant 3 : index
    %c0_54 = arith.constant 0 : index
    %c0_55 = arith.constant 0 : index
    %98 = vector.load %arg8[%c0_53, %c3, %c0_54, %c0_55] : memref<1x13x8x128xf32, #tpu.memory_space<vmem>>, vector<1x1x8x128xf32>
    %99 = vector.shape_cast %98 : vector<1x1x8x128xf32> to vector<8x128xf32>
    %100 = vector.shape_cast %63 : vector<32x128xf32> to vector<4x8x128xf32>
    %cst_56 = arith.constant dense<0.000000e+00> : vector<8x128xf32>
    %101 = vector.multi_reduction <add>, %100, %cst_56 [0] : vector<4x8x128xf32> to vector<8x128xf32>
    %102 = arith.addf %99, %101 : vector<8x128xf32>
    %c0_57 = arith.constant 0 : index
    %c3_58 = arith.constant 3 : index
    %c0_59 = arith.constant 0 : index
    %c0_60 = arith.constant 0 : index
    %103 = vector.load %arg8[%c0_57, %c3_58, %c0_59, %c0_60] : memref<1x13x8x128xf32, #tpu.memory_space<vmem>>, vector<1x1x8x128xf32>
    %104 = vector.shape_cast %103 : vector<1x1x8x128xf32> to vector<8x128xf32>
    %105 = vector.shape_cast %102 : vector<8x128xf32> to vector<1x1x8x128xf32>
    tpu.vector_store %arg8[%c0_57, %c3_58, %c0_59, %c0_60], %105 {strides = array<i32>} : memref<1x13x8x128xf32, #tpu.memory_space<vmem>>, vector<1x1x8x128xf32>,
    %c0_61 = arith.constant 0 : index
    %c4 = arith.constant 4 : index
    %c0_62 = arith.constant 0 : index
    %c0_63 = arith.constant 0 : index
    %106 = vector.load %arg8[%c0_61, %c4, %c0_62, %c0_63] : memref<1x13x8x128xf32, #tpu.memory_space<vmem>>, vector<1x1x8x128xf32>
    %107 = vector.shape_cast %106 : vector<1x1x8x128xf32> to vector<8x128xf32>
    %108 = vector.shape_cast %64 : vector<32x128xf32> to vector<4x8x128xf32>
    %cst_64 = arith.constant dense<0.000000e+00> : vector<8x128xf32>
    %109 = vector.multi_reduction <add>, %108, %cst_64 [0] : vector<4x8x128xf32> to vector<8x128xf32>
    %110 = arith.addf %107, %109 : vector<8x128xf32>
    %c0_65 = arith.constant 0 : index
    %c4_66 = arith.constant 4 : index
    %c0_67 = arith.constant 0 : index
    %c0_68 = arith.constant 0 : index
    %111 = vector.load %arg8[%c0_65, %c4_66, %c0_67, %c0_68] : memref<1x13x8x128xf32, #tpu.memory_space<vmem>>, vector<1x1x8x128xf32>
    %112 = vector.shape_cast %111 : vector<1x1x8x128xf32> to vector<8x128xf32>
    %113 = vector.shape_cast %110 : vector<8x128xf32> to vector<1x1x8x128xf32>
    tpu.vector_store %arg8[%c0_65, %c4_66, %c0_67, %c0_68], %113 {strides = array<i32>} : memref<1x13x8x128xf32, #tpu.memory_space<vmem>>, vector<1x1x8x128xf32>,
    %c0_69 = arith.constant 0 : index
    %c5 = arith.constant 5 : index
    %c0_70 = arith.constant 0 : index
    %c0_71 = arith.constant 0 : index
    %114 = vector.load %arg8[%c0_69, %c5, %c0_70, %c0_71] : memref<1x13x8x128xf32, #tpu.memory_space<vmem>>, vector<1x1x8x128xf32>
    %115 = vector.shape_cast %114 : vector<1x1x8x128xf32> to vector<8x128xf32>
    %116 = vector.shape_cast %65 : vector<32x128xf32> to vector<4x8x128xf32>
    %cst_72 = arith.constant dense<0.000000e+00> : vector<8x128xf32>
    %117 = vector.multi_reduction <add>, %116, %cst_72 [0] : vector<4x8x128xf32> to vector<8x128xf32>
    %118 = arith.addf %115, %117 : vector<8x128xf32>
    %c0_73 = arith.constant 0 : index
    %c5_74 = arith.constant 5 : index
    %c0_75 = arith.constant 0 : index
    %c0_76 = arith.constant 0 : index
    %119 = vector.load %arg8[%c0_73, %c5_74, %c0_75, %c0_76] : memref<1x13x8x128xf32, #tpu.memory_space<vmem>>, vector<1x1x8x128xf32>
    %120 = vector.shape_cast %119 : vector<1x1x8x128xf32> to vector<8x128xf32>
    %121 = vector.shape_cast %118 : vector<8x128xf32> to vector<1x1x8x128xf32>
    tpu.vector_store %arg8[%c0_73, %c5_74, %c0_75, %c0_76], %121 {strides = array<i32>} : memref<1x13x8x128xf32, #tpu.memory_space<vmem>>, vector<1x1x8x128xf32>,
    %c0_77 = arith.constant 0 : index
    %c6 = arith.constant 6 : index
    %c0_78 = arith.constant 0 : index
    %c0_79 = arith.constant 0 : index
    %122 = vector.load %arg8[%c0_77, %c6, %c0_78, %c0_79] : memref<1x13x8x128xf32, #tpu.memory_space<vmem>>, vector<1x1x8x128xf32>
    %123 = vector.shape_cast %122 : vector<1x1x8x128xf32> to vector<8x128xf32>
    %124 = vector.shape_cast %13 : vector<32x128xf32> to vector<4x8x128xf32>
    %cst_80 = arith.constant dense<0.000000e+00> : vector<8x128xf32>
    %125 = vector.multi_reduction <add>, %124, %cst_80 [0] : vector<4x8x128xf32> to vector<8x128xf32>
    %126 = arith.addf %123, %125 : vector<8x128xf32>
    %c0_81 = arith.constant 0 : index
    %c6_82 = arith.constant 6 : index
    %c0_83 = arith.constant 0 : index
    %c0_84 = arith.constant 0 : index
    %127 = vector.load %arg8[%c0_81, %c6_82, %c0_83, %c0_84] : memref<1x13x8x128xf32, #tpu.memory_space<vmem>>, vector<1x1x8x128xf32>
    %128 = vector.shape_cast %127 : vector<1x1x8x128xf32> to vector<8x128xf32>
    %129 = vector.shape_cast %126 : vector<8x128xf32> to vector<1x1x8x128xf32>
    tpu.vector_store %arg8[%c0_81, %c6_82, %c0_83, %c0_84], %129 {strides = array<i32>} : memref<1x13x8x128xf32, #tpu.memory_space<vmem>>, vector<1x1x8x128xf32>,
    %c0_85 = arith.constant 0 : index
    %c7 = arith.constant 7 : index
    %c0_86 = arith.constant 0 : index
    %c0_87 = arith.constant 0 : index
    %130 = vector.load %arg8[%c0_85, %c7, %c0_86, %c0_87] : memref<1x13x8x128xf32, #tpu.memory_space<vmem>>, vector<1x1x8x128xf32>
    %131 = vector.shape_cast %130 : vector<1x1x8x128xf32> to vector<8x128xf32>
    %132 = vector.shape_cast %66 : vector<32x128xf32> to vector<4x8x128xf32>
    %cst_88 = arith.constant dense<0.000000e+00> : vector<8x128xf32>
    %133 = vector.multi_reduction <add>, %132, %cst_88 [0] : vector<4x8x128xf32> to vector<8x128xf32>
    %134 = arith.addf %131, %133 : vector<8x128xf32>
    %c0_89 = arith.constant 0 : index
    %c7_90 = arith.constant 7 : index
    %c0_91 = arith.constant 0 : index
    %c0_92 = arith.constant 0 : index
    %135 = vector.load %arg8[%c0_89, %c7_90, %c0_91, %c0_92] : memref<1x13x8x128xf32, #tpu.memory_space<vmem>>, vector<1x1x8x128xf32>
    %136 = vector.shape_cast %135 : vector<1x1x8x128xf32> to vector<8x128xf32>
    %137 = vector.shape_cast %134 : vector<8x128xf32> to vector<1x1x8x128xf32>
    tpu.vector_store %arg8[%c0_89, %c7_90, %c0_91, %c0_92], %137 {strides = array<i32>} : memref<1x13x8x128xf32, #tpu.memory_space<vmem>>, vector<1x1x8x128xf32>,
    %c0_93 = arith.constant 0 : index
    %c8 = arith.constant 8 : index
    %c0_94 = arith.constant 0 : index
    %c0_95 = arith.constant 0 : index
    %138 = vector.load %arg8[%c0_93, %c8, %c0_94, %c0_95] : memref<1x13x8x128xf32, #tpu.memory_space<vmem>>, vector<1x1x8x128xf32>
    %139 = vector.shape_cast %138 : vector<1x1x8x128xf32> to vector<8x128xf32>
    %140 = vector.shape_cast %67 : vector<32x128xf32> to vector<4x8x128xf32>
    %cst_96 = arith.constant dense<0.000000e+00> : vector<8x128xf32>
    %141 = vector.multi_reduction <add>, %140, %cst_96 [0] : vector<4x8x128xf32> to vector<8x128xf32>
    %142 = arith.addf %139, %141 : vector<8x128xf32>
    %c0_97 = arith.constant 0 : index
    %c8_98 = arith.constant 8 : index
    %c0_99 = arith.constant 0 : index
    %c0_100 = arith.constant 0 : index
    %143 = vector.load %arg8[%c0_97, %c8_98, %c0_99, %c0_100] : memref<1x13x8x128xf32, #tpu.memory_space<vmem>>, vector<1x1x8x128xf32>
    %144 = vector.shape_cast %143 : vector<1x1x8x128xf32> to vector<8x128xf32>
    %145 = vector.shape_cast %142 : vector<8x128xf32> to vector<1x1x8x128xf32>
    tpu.vector_store %arg8[%c0_97, %c8_98, %c0_99, %c0_100], %145 {strides = array<i32>} : memref<1x13x8x128xf32, #tpu.memory_space<vmem>>, vector<1x1x8x128xf32>,
    %c0_101 = arith.constant 0 : index
    %c9 = arith.constant 9 : index
    %c0_102 = arith.constant 0 : index
    %c0_103 = arith.constant 0 : index
    %146 = vector.load %arg8[%c0_101, %c9, %c0_102, %c0_103] : memref<1x13x8x128xf32, #tpu.memory_space<vmem>>, vector<1x1x8x128xf32>
    %147 = vector.shape_cast %146 : vector<1x1x8x128xf32> to vector<8x128xf32>
    %148 = vector.shape_cast %68 : vector<32x128xf32> to vector<4x8x128xf32>
    %cst_104 = arith.constant dense<0.000000e+00> : vector<8x128xf32>
    %149 = vector.multi_reduction <add>, %148, %cst_104 [0] : vector<4x8x128xf32> to vector<8x128xf32>
    %150 = arith.addf %147, %149 : vector<8x128xf32>
    %c0_105 = arith.constant 0 : index
    %c9_106 = arith.constant 9 : index
    %c0_107 = arith.constant 0 : index
    %c0_108 = arith.constant 0 : index
    %151 = vector.load %arg8[%c0_105, %c9_106, %c0_107, %c0_108] : memref<1x13x8x128xf32, #tpu.memory_space<vmem>>, vector<1x1x8x128xf32>
    %152 = vector.shape_cast %151 : vector<1x1x8x128xf32> to vector<8x128xf32>
    %153 = vector.shape_cast %150 : vector<8x128xf32> to vector<1x1x8x128xf32>
    tpu.vector_store %arg8[%c0_105, %c9_106, %c0_107, %c0_108], %153 {strides = array<i32>} : memref<1x13x8x128xf32, #tpu.memory_space<vmem>>, vector<1x1x8x128xf32>,
    %c0_109 = arith.constant 0 : index
    %c10 = arith.constant 10 : index
    %c0_110 = arith.constant 0 : index
    %c0_111 = arith.constant 0 : index
    %154 = vector.load %arg8[%c0_109, %c10, %c0_110, %c0_111] : memref<1x13x8x128xf32, #tpu.memory_space<vmem>>, vector<1x1x8x128xf32>
    %155 = vector.shape_cast %154 : vector<1x1x8x128xf32> to vector<8x128xf32>
    %156 = vector.shape_cast %70 : vector<32x128xf32> to vector<4x8x128xf32>
    %cst_112 = arith.constant dense<0.000000e+00> : vector<8x128xf32>
    %157 = vector.multi_reduction <add>, %156, %cst_112 [0] : vector<4x8x128xf32> to vector<8x128xf32>
    %158 = arith.addf %155, %157 : vector<8x128xf32>
    %c0_113 = arith.constant 0 : index
    %c10_114 = arith.constant 10 : index
    %c0_115 = arith.constant 0 : index
    %c0_116 = arith.constant 0 : index
    %159 = vector.load %arg8[%c0_113, %c10_114, %c0_115, %c0_116] : memref<1x13x8x128xf32, #tpu.memory_space<vmem>>, vector<1x1x8x128xf32>
    %160 = vector.shape_cast %159 : vector<1x1x8x128xf32> to vector<8x128xf32>
    %161 = vector.shape_cast %158 : vector<8x128xf32> to vector<1x1x8x128xf32>
    tpu.vector_store %arg8[%c0_113, %c10_114, %c0_115, %c0_116], %161 {strides = array<i32>} : memref<1x13x8x128xf32, #tpu.memory_space<vmem>>, vector<1x1x8x128xf32>,
    %c0_117 = arith.constant 0 : index
    %c11 = arith.constant 11 : index
    %c0_118 = arith.constant 0 : index
    %c0_119 = arith.constant 0 : index
    %162 = vector.load %arg8[%c0_117, %c11, %c0_118, %c0_119] : memref<1x13x8x128xf32, #tpu.memory_space<vmem>>, vector<1x1x8x128xf32>
    %163 = vector.shape_cast %162 : vector<1x1x8x128xf32> to vector<8x128xf32>
    %164 = vector.shape_cast %71 : vector<32x128xf32> to vector<4x8x128xf32>
    %cst_120 = arith.constant dense<0.000000e+00> : vector<8x128xf32>
    %165 = vector.multi_reduction <add>, %164, %cst_120 [0] : vector<4x8x128xf32> to vector<8x128xf32>
    %166 = arith.addf %163, %165 : vector<8x128xf32>
    %c0_121 = arith.constant 0 : index
    %c11_122 = arith.constant 11 : index
    %c0_123 = arith.constant 0 : index
    %c0_124 = arith.constant 0 : index
    %167 = vector.load %arg8[%c0_121, %c11_122, %c0_123, %c0_124] : memref<1x13x8x128xf32, #tpu.memory_space<vmem>>, vector<1x1x8x128xf32>
    %168 = vector.shape_cast %167 : vector<1x1x8x128xf32> to vector<8x128xf32>
    %169 = vector.shape_cast %166 : vector<8x128xf32> to vector<1x1x8x128xf32>
    tpu.vector_store %arg8[%c0_121, %c11_122, %c0_123, %c0_124], %169 {strides = array<i32>} : memref<1x13x8x128xf32, #tpu.memory_space<vmem>>, vector<1x1x8x128xf32>,
    %c0_125 = arith.constant 0 : index
    %c12 = arith.constant 12 : index
    %c0_126 = arith.constant 0 : index
    %c0_127 = arith.constant 0 : index
    %170 = vector.load %arg8[%c0_125, %c12, %c0_126, %c0_127] : memref<1x13x8x128xf32, #tpu.memory_space<vmem>>, vector<1x1x8x128xf32>
    %171 = vector.shape_cast %170 : vector<1x1x8x128xf32> to vector<8x128xf32>
    %172 = vector.shape_cast %73 : vector<32x128xf32> to vector<4x8x128xf32>
    %cst_128 = arith.constant dense<0.000000e+00> : vector<8x128xf32>
    %173 = vector.multi_reduction <add>, %172, %cst_128 [0] : vector<4x8x128xf32> to vector<8x128xf32>
    %174 = arith.addf %171, %173 : vector<8x128xf32>
    %c0_129 = arith.constant 0 : index
    %c12_130 = arith.constant 12 : index
    %c0_131 = arith.constant 0 : index
    %c0_132 = arith.constant 0 : index
    %175 = vector.load %arg8[%c0_129, %c12_130, %c0_131, %c0_132] : memref<1x13x8x128xf32, #tpu.memory_space<vmem>>, vector<1x1x8x128xf32>
    %176 = vector.shape_cast %175 : vector<1x1x8x128xf32> to vector<8x128xf32>
    %177 = vector.shape_cast %174 : vector<8x128xf32> to vector<1x1x8x128xf32>
    tpu.vector_store %arg8[%c0_129, %c12_130, %c0_131, %c0_132], %177 {strides = array<i32>} : memref<1x13x8x128xf32, #tpu.memory_space<vmem>>, vector<1x1x8x128xf32>,
    return
  }
  func.func @transform_0(%arg0: i32, %arg1: i32) -> (i32, i32) {
    %c1_i32 = arith.constant 1 : i32
    %0 = arith.muli %arg0, %c1_i32 : i32
    %1 = arith.addi %0, %arg1 : i32
    %c0_i32 = arith.constant 0 : i32
    %c0_i32_0 = arith.constant 0 : i32
    return %1, %c0_i32 : i32, i32
  }
  func.func @transform_1(%arg0: i32, %arg1: i32) -> (i32, i32) {
    %c1_i32 = arith.constant 1 : i32
    %0 = arith.muli %arg0, %c1_i32 : i32
    %1 = arith.addi %0, %arg1 : i32
    %c0_i32 = arith.constant 0 : i32
    %c0_i32_0 = arith.constant 0 : i32
    return %1, %c0_i32 : i32, i32
  }
  func.func @transform_2(%arg0: i32, %arg1: i32) -> (i32, i32) {
    %c1_i32 = arith.constant 1 : i32
    %0 = arith.muli %arg0, %c1_i32 : i32
    %1 = arith.addi %0, %arg1 : i32
    %c0_i32 = arith.constant 0 : i32
    %c0_i32_0 = arith.constant 0 : i32
    return %1, %c0_i32 : i32, i32
  }
  func.func @transform_3(%arg0: i32, %arg1: i32) -> (i32, i32) {
    %c1_i32 = arith.constant 1 : i32
    %0 = arith.muli %arg0, %c1_i32 : i32
    %1 = arith.addi %0, %arg1 : i32
    %c0_i32 = arith.constant 0 : i32
    %c0_i32_0 = arith.constant 0 : i32
    return %1, %c0_i32 : i32, i32
  }
  func.func @transform_4(%arg0: i32, %arg1: i32) -> (i32, i32) {
    %c1_i32 = arith.constant 1 : i32
    %0 = arith.muli %arg0, %c1_i32 : i32
    %1 = arith.addi %0, %arg1 : i32
    %c0_i32 = arith.constant 0 : i32
    %c0_i32_0 = arith.constant 0 : i32
    return %1, %c0_i32 : i32, i32
  }
  func.func @transform_5(%arg0: i32, %arg1: i32) -> (i32, i32) {
    %c1_i32 = arith.constant 1 : i32
    %0 = arith.muli %arg0, %c1_i32 : i32
    %1 = arith.addi %0, %arg1 : i32
    %c0_i32 = arith.constant 0 : i32
    %c0_i32_0 = arith.constant 0 : i32
    return %1, %c0_i32 : i32, i32
  }
  func.func @transform_6(%arg0: i32, %arg1: i32) -> (i32, i32, i32, i32) {
    %c0_i32 = arith.constant 0 : i32
    %c0_i32_0 = arith.constant 0 : i32
    %c0_i32_1 = arith.constant 0 : i32
    %c0_i32_2 = arith.constant 0 : i32
    return %arg0, %c0_i32, %c0_i32_0, %c0_i32_1 : i32, i32, i32, i32
  }
}

</mosaic_0001>

<llo_original>
// kernel: tpu_custom_call.1
$region0: #{tpu_custom_call.1}
  #allocation0 [shape = 'u32[]', space=smem, size = 0x4, offset = 0x4, fixed_abs, tag = 'smem constant byte address 0x4 - core index']
  #allocation1 [shape = 'u32[144,128]{1,0:T(1,128)}', space=vmem, size = 0x12000, scoped, tag = 'internal scratch']
  %s0 = inlined_call_operand.hbm [shape: f32[64,128], index: 0, kind: input, shape index: {}]
  %s1 = inlined_call_operand.hbm [shape: f32[64,128], index: 1, kind: input, shape index: {}]
  %s2 = inlined_call_operand.hbm [shape: f32[64,128], index: 2, kind: input, shape index: {}]
  %s3 = inlined_call_operand.hbm [shape: f32[64,128], index: 3, kind: input, shape index: {}]
  %s4 = inlined_call_operand.hbm [shape: f32[64,128], index: 4, kind: input, shape index: {}]
  %s5 = inlined_call_operand.vmem [shape: s8[64,128], index: 5, kind: input, shape index: {}]
  %s6 = inlined_call_operand.hbm [shape: f32[2,13,8,128], index: 6, kind: output, shape index: {}]
  %s7 = sld [smem:[#allocation0]]
  $region81: #{tpu_custom_call.1} parent=0
    _
  %s9 = ssub.s32 1, %s7
  %s10 = scalar_select 0, %s9, %s7
  $region1: #{tpu_custom_call.1} parent=0
    #allocation2 [shape = 'u8[32768]{0}', space=vmem, size = 0x8000, scoped, tag = 'input window, operand 0']
    #allocation3 [shape = 's32[2]{0}', space=sflag, size = 0x8, scoped, tag = 'scoped memory for tpu_custom_call.1']
    #allocation4 [shape = 's32[2]{0}', space=sflag, size = 0x8, scoped, tag = 'scoped memory for tpu_custom_call.1']
    #allocation5 [shape = 'u8[32768]{0}', space=vmem, size = 0x8000, scoped, tag = 'input window, operand 1']
    #allocation6 [shape = 's32[2]{0}', space=sflag, size = 0x8, scoped, tag = 'scoped memory for tpu_custom_call.1']
    #allocation7 [shape = 'u8[32768]{0}', space=vmem, size = 0x8000, scoped, tag = 'input window, operand 2']
    #allocation8 [shape = 'u8[32768]{0}', space=vmem, size = 0x8000, scoped, tag = 'input window, operand 3']
    #allocation9 [shape = 's32[2]{0}', space=sflag, size = 0x8, scoped, tag = 'scoped memory for tpu_custom_call.1']
    #allocation10 [shape = 'u8[32768]{0}', space=vmem, size = 0x8000, scoped, tag = 'input window, operand 4']
    #allocation11 [shape = 'u8[106496]{0}', space=vmem, size = 0x1a000, scoped, tag = 'output window, operand 0']
    %11 = vsyncpa [#allocation3], 0
    %s12 = scalar_lea.sflag [#allocation3], 1
    %13 = vsyncpa %s12, 0
    %14 = vsyncpa [#allocation6], 0
    %s15 = scalar_lea.sflag [#allocation6], 1
    %16 = vsyncpa %s15, 0
    %17 = vsyncpa [#allocation9], 0
    %s18 = scalar_lea.sflag [#allocation9], 1
    %19 = vsyncpa %s18, 0
    %20 = vsyncpa [#allocation4], 0
    %s21 = scalar_lea.sflag [#allocation4], 1
    %22 = vsyncpa %s21, 0
    loop: start=0, step=1, limit=4
    $region2: #{tpu_custom_call.1} parent=1 // loop_pre_header
      _
    $region3: #{tpu_custom_call.1} parent=1 // loop_header
      %s24 = sphi 0, %s28
      %p25 = scmp.ge.s32.totalorder %s24, 4
      %s31 = sphi 0, %s43
      %s32 = sphi 0, %s39
      %s33 = sphi 0, %s31
      %s34 = sphi 0, %s32
      %s35 = sphi 0, %s33
      %s36 = sphi 0, %s34
      %s48 = sphi 0, %s50
      %s51 = sphi 0, %s48
      %s52 = sphi 0, %s51
      %s68 = sphi 0, %s52
      %s76 = sphi 0, %s78
      %s79 = sphi 0, %s76
      %s80 = sphi 0, %s79
      %s96 = sphi 0, %s80
      %s104 = sphi 0, %s106
      %s107 = sphi 0, %s104
      %s108 = sphi 0, %s107
      %s124 = sphi 0, %s108
      %s132 = sphi 0, %s134
      %s135 = sphi 0, %s132
      %s136 = sphi 0, %s135
      %s152 = sphi 0, %s136
      %s160 = sphi 0, %s162
      %s163 = sphi 0, %s160
      %s164 = sphi 0, %s163
      %s180 = sphi 0, %s164
      %s188 = sphi 0, %s190
      %s191 = sphi 0, %s188
      %s192 = sphi 0, %s191
      %s208 = sphi 0, %s192
      %s214 = sphi 0, %s216
      %s217 = sphi 0, %s214
      %s218 = sphi 0, %s217
      %s234 = sphi 0, %s218
    $region4: #{tpu_custom_call.1} parent=1 // loop_header_branch
      %27 = sbr.rel (%p25) target = $region8
    $region5: #{tpu_custom_call.1} parent=1 // loop_body
      %s29 = ssub.s32 %s24, 1
      %s30 = ssub.s32 %s24, 2
      %s37 = sadd.s32 1, %s32
      %p38 = scmp.ge.s32.totalorder %s37, 1
      %s39 = scalar_select %p38, 0, %s37
      %s40 = sadd.s32 1, %s31
      %s41 = scalar_select %p38, %s40, %s31
      %p42 = scmp.ge.s32.totalorder %s41, 2
      %s43 = scalar_select %p42, 0, %s41
      %s44 = sadd.s32 %s31, %s32
      %s45 = sadd.s32 %s43, %s39
      %s46 = ssub.s32 %s44, %s45
      %p47 = scmp.eq.s32.totalorder %s46, 0
      %s49 = sadd.s32 %s48, 1
      %s50 = scalar_select %p47, %s48, %s49
      %p53 = pneg %p47
      %p54 = scmp.eq.s32.totalorder %s24, 1
      %p55 = por %p53, %p54
      %p56 = scmp.ne.s32.totalorder %s48, %s51
      %p57 = scmp.eq.s32.totalorder %s24, 0
      %p58 = por %p56, %p57
      %p59 = scmp.ne.s32.totalorder %s48, %s51
      %p60 = scmp.eq.s32.totalorder %s29, 1
      %p61 = por %p59, %p60
      %p62 = scmp.ne.s32.totalorder %s51, %s52
      %p63 = scmp.eq.s32.totalorder %s29, 0
      %p64 = por %p62, %p63
      %p65 = scmp.ne.s32.totalorder %s51, %s52
      %p66 = scmp.eq.s32.totalorder %s30, 1
      %p67 = por %p65, %p66
      %p69 = scmp.ne.s32.totalorder %s52, %s68
      %p70 = scmp.eq.s32.totalorder %s30, 0
      %p71 = por %p69, %p70
      %s72 = sadd.s32 %s31, %s32
      %s73 = sadd.s32 %s43, %s39
      %s74 = ssub.s32 %s72, %s73
      %p75 = scmp.eq.s32.totalorder %s74, 0
      %s77 = sadd.s32 %s76, 1
      %s78 = scalar_select %p75, %s76, %s77
      %p81 = pneg %p75
      %p82 = scmp.eq.s32.totalorder %s24, 1
      %p83 = por %p81, %p82
      %p84 = scmp.ne.s32.totalorder %s76, %s79
      %p85 = scmp.eq.s32.totalorder %s24, 0
      %p86 = por %p84, %p85
      %p87 = scmp.ne.s32.totalorder %s76, %s79
      %p88 = scmp.eq.s32.totalorder %s29, 1
      %p89 = por %p87, %p88
      %p90 = scmp.ne.s32.totalorder %s79, %s80
      %p91 = scmp.eq.s32.totalorder %s29, 0
      %p92 = por %p90, %p91
      %p93 = scmp.ne.s32.totalorder %s79, %s80
      %p94 = scmp.eq.s32.totalorder %s30, 1
      %p95 = por %p93, %p94
      %p97 = scmp.ne.s32.totalorder %s80, %s96
      %p98 = scmp.eq.s32.totalorder %s30, 0
      %p99 = por %p97, %p98
      %s100 = sadd.s32 %s31, %s32
      %s101 = sadd.s32 %s43, %s39
      %s102 = ssub.s32 %s100, %s101
      %p103 = scmp.eq.s32.totalorder %s102, 0
      %s105 = sadd.s32 %s104, 1
      %s106 = scalar_select %p103, %s104, %s105
      %p109 = pneg %p103
      %p110 = scmp.eq.s32.totalorder %s24, 1
      %p111 = por %p109, %p110
      %p112 = scmp.ne.s32.totalorder %s104, %s107
      %p113 = scmp.eq.s32.totalorder %s24, 0
      %p114 = por %p112, %p113
      %p115 = scmp.ne.s32.totalorder %s104, %s107
      %p116 = scmp.eq.s32.totalorder %s29, 1
      %p117 = por %p115, %p116
      %p118 = scmp.ne.s32.totalorder %s107, %s108
      %p119 = scmp.eq.s32.totalorder %s29, 0
      %p120 = por %p118, %p119
      %p121 = scmp.ne.s32.totalorder %s107, %s108
      %p122 = scmp.eq.s32.totalorder %s30, 1
      %p123 = por %p121, %p122
      %p125 = scmp.ne.s32.totalorder %s108, %s124
      %p126 = scmp.eq.s32.totalorder %s30, 0
      %p127 = por %p125, %p126
      %s128 = sadd.s32 %s31, %s32
      %s129 = sadd.s32 %s43, %s39
      %s130 = ssub.s32 %s128, %s129
      %p131 = scmp.eq.s32.totalorder %s130, 0
      %s133 = sadd.s32 %s132, 1
      %s134 = scalar_select %p131, %s132, %s133
      %p137 = pneg %p131
      %p138 = scmp.eq.s32.totalorder %s24, 1
      %p139 = por %p137, %p138
      %p140 = scmp.ne.s32.totalorder %s132, %s135
      %p141 = scmp.eq.s32.totalorder %s24, 0
      %p142 = por %p140, %p141
      %p143 = scmp.ne.s32.totalorder %s132, %s135
      %p144 = scmp.eq.s32.totalorder %s29, 1
      %p145 = por %p143, %p144
      %p146 = scmp.ne.s32.totalorder %s135, %s136
      %p147 = scmp.eq.s32.totalorder %s29, 0
      %p148 = por %p146, %p147
      %p149 = scmp.ne.s32.totalorder %s135, %s136
      %p150 = scmp.eq.s32.totalorder %s30, 1
      %p151 = por %p149, %p150
      %p153 = scmp.ne.s32.totalorder %s136, %s152
      %p154 = scmp.eq.s32.totalorder %s30, 0
      %p155 = por %p153, %p154
      %s156 = sadd.s32 %s31, %s32
      %s157 = sadd.s32 %s43, %s39
      %s158 = ssub.s32 %s156, %s157
      %p159 = scmp.eq.s32.totalorder %s158, 0
      %s161 = sadd.s32 %s160, 1
      %s162 = scalar_select %p159, %s160, %s161
      %p165 = pneg %p159
      %p166 = scmp.eq.s32.totalorder %s24, 1
      %p167 = por %p165, %p166
      %p168 = scmp.ne.s32.totalorder %s160, %s163
      %p169 = scmp.eq.s32.totalorder %s24, 0
      %p170 = por %p168, %p169
      %p171 = scmp.ne.s32.totalorder %s160, %s163
      %p172 = scmp.eq.s32.totalorder %s29, 1
      %p173 = por %p171, %p172
      %p174 = scmp.ne.s32.totalorder %s163, %s164
      %p175 = scmp.eq.s32.totalorder %s29, 0
      %p176 = por %p174, %p175
      %p177 = scmp.ne.s32.totalorder %s163, %s164
      %p178 = scmp.eq.s32.totalorder %s30, 1
      %p179 = por %p177, %p178
      %p181 = scmp.ne.s32.totalorder %s164, %s180
      %p182 = scmp.eq.s32.totalorder %s30, 0
      %p183 = por %p181, %p182
      %s184 = sadd.s32 %s31, %s32
      %s185 = sadd.s32 %s43, %s39
      %s186 = ssub.s32 %s184, %s185
      %p187 = scmp.eq.s32.totalorder %s186, 0
      %s189 = sadd.s32 %s188, 1
      %s190 = scalar_select %p187, %s188, %s189
      %p193 = pneg %p187
      %p194 = scmp.eq.s32.totalorder %s24, 1
      %p195 = por %p193, %p194
      %p196 = scmp.ne.s32.totalorder %s188, %s191
      %p197 = scmp.eq.s32.totalorder %s24, 0
      %p198 = por %p196, %p197
      %p199 = scmp.ne.s32.totalorder %s188, %s191
      %p200 = scmp.eq.s32.totalorder %s29, 1
      %p201 = por %p199, %p200
      %p202 = scmp.ne.s32.totalorder %s191, %s192
      %p203 = scmp.eq.s32.totalorder %s29, 0
      %p204 = por %p202, %p203
      %p205 = scmp.ne.s32.totalorder %s191, %s192
      %p206 = scmp.eq.s32.totalorder %s30, 1
      %p207 = por %p205, %p206
      %p209 = scmp.ne.s32.totalorder %s192, %s208
      %p210 = scmp.eq.s32.totalorder %s30, 0
      %p211 = por %p209, %p210
      %s212 = ssub.s32 %s31, %s43
      %p213 = scmp.eq.s32.totalorder %s212, 0
      %s215 = sadd.s32 %s214, 1
      %s216 = scalar_select %p213, %s214, %s215
      %p219 = pneg %p213
      %p220 = scmp.eq.s32.totalorder %s24, 1
      %p221 = por %p219, %p220
      %p222 = scmp.ne.s32.totalorder %s214, %s217
      %p223 = scmp.eq.s32.totalorder %s24, 0
      %p224 = por %p222, %p223
      %p225 = scmp.ne.s32.totalorder %s214, %s217
      %p226 = scmp.eq.s32.totalorder %s29, 1
      %p227 = por %p225, %p226
      %p228 = scmp.ne.s32.totalorder %s217, %s218
      %p229 = scmp.eq.s32.totalorder %s29, 0
      %p230 = por %p228, %p229
      %p231 = scmp.ne.s32.totalorder %s217, %s218
      %p232 = scmp.eq.s32.totalorder %s30, 1
      %p233 = por %p231, %p232
      %p235 = scmp.ne.s32.totalorder %s218, %s234
      %p236 = scmp.eq.s32.totalorder %s30, 0
      %p237 = por %p235, %p236
      %p238 = scmp.le.s32.totalorder 1, %s24
      %p239 = scmp.lt.s32.totalorder %s24, 3
      %p240 = pnand %p238, %p239
      %p241 = pneg %p240
      // Predicated region
      $region9: #{tpu_custom_call.1} parent=5 // pred_check
        _
      $region10: #{tpu_custom_call.1} parent=5 // pred_check_branch
        %243 = sbr.rel (%p240) target = $region12
      $region11: #{tpu_custom_call.1} parent=5 // pred_region
        %s244 = ssub.s32 %s24, 1
      $region12: #{tpu_custom_call.1} parent=5 // pred_fallthru
        _
      %p245 = scmp.lt.s32.totalorder %s24, 2
      // Predicated region
      $region13: #{tpu_custom_call.1} parent=5 // pred_check
        %p246 = pneg %p245
      $region14: #{tpu_custom_call.1} parent=5 // pred_check_branch
        %248 = sbr.rel (%p246) target = $region16
      $region15: #{tpu_custom_call.1} parent=5 // pred_region
        // Predicated region
        $region17: #{tpu_custom_call.1} parent=15 // pred_check
          %p249 = pneg %p58
        $region18: #{tpu_custom_call.1} parent=15 // pred_check_branch
          %251 = sbr.rel (%p249) target = $region20
        $region19: #{tpu_custom_call.1} parent=15 // pred_region
          %s252 = sand.u32 %s48, 1
          %s253 = scalar_lea.sflag [#allocation3], %s252
          %s254 = sand.u32 %s48, 1
          %s255 = smul.addr %s254, 32
          %s256 = scalar_lea.vmem [#allocation2], %s255
          %s257 = sadd.s32 %s31, %s32
          %s258 = smul.u32 4, %s257
          %s260 = ssub.s32 512, 512
          %261 = vsyncadd %s253, %s260
          %s262 = smul.addr %s258, 128
          %s263 = scalar_lea.hbm %s0, %s262
          %s264 = sshll.u32 %s256, 4
          %s265 = int_to_ptr.vmem [resolvable:$true] %s264
          %270 = dma.hbm_to_vmem [thread:$0]  %s263, 512, %s265, %s253, 128, 128, 8
        $region20: #{tpu_custom_call.1} parent=15 // pred_fallthru
          _
        // Predicated region
        $region21: #{tpu_custom_call.1} parent=15 // pred_check
          %p271 = pneg %p86
        $region22: #{tpu_custom_call.1} parent=15 // pred_check_branch
          %273 = sbr.rel (%p271) target = $region24
        $region23: #{tpu_custom_call.1} parent=15 // pred_region
          %s274 = sand.u32 %s24, 1
          %s275 = scalar_lea.sflag [#allocation6], %s274
          %s276 = sand.u32 %s76, 1
          %s277 = smul.addr %s276, 32
          %s278 = scalar_lea.vmem [#allocation5], %s277
          %s279 = sadd.s32 %s31, %s32
          %s280 = smul.u32 4, %s279
          %s282 = ssub.s32 512, 512
          %283 = vsyncadd %s275, %s282
          %s284 = smul.addr %s280, 128
          %s285 = scalar_lea.hbm %s1, %s284
          %s286 = sshll.u32 %s278, 4
          %s287 = int_to_ptr.vmem [resolvable:$true] %s286
          %292 = dma.hbm_to_vmem [thread:$0]  %s285, 512, %s287, %s275, 128, 128, 8
        $region24: #{tpu_custom_call.1} parent=15 // pred_fallthru
          _
        // Predicated region
        $region25: #{tpu_custom_call.1} parent=15 // pred_check
          %p293 = pneg %p114
        $region26: #{tpu_custom_call.1} parent=15 // pred_check_branch
          %295 = sbr.rel (%p293) target = $region28
        $region27: #{tpu_custom_call.1} parent=15 // pred_region
          %s296 = sand.u32 %s24, 1
          %s297 = scalar_lea.sflag [#allocation6], %s296
          %s298 = sand.u32 %s104, 1
          %s299 = smul.addr %s298, 32
          %s300 = scalar_lea.vmem [#allocation7], %s299
          %s301 = sadd.s32 %s31, %s32
          %s302 = smul.u32 4, %s301
          %s304 = ssub.s32 512, 512
          %305 = vsyncadd %s297, %s304
          %s306 = smul.addr %s302, 128
          %s307 = scalar_lea.hbm %s2, %s306
          %s308 = sshll.u32 %s300, 4
          %s309 = int_to_ptr.vmem [resolvable:$true] %s308
          %314 = dma.hbm_to_vmem [thread:$0]  %s307, 512, %s309, %s297, 128, 128, 8
        $region28: #{tpu_custom_call.1} parent=15 // pred_fallthru
          _
        // Predicated region
        $region29: #{tpu_custom_call.1} parent=15 // pred_check
          %p315 = pneg %p142
        $region30: #{tpu_custom_call.1} parent=15 // pred_check_branch
          %317 = sbr.rel (%p315) target = $region32
        $region31: #{tpu_custom_call.1} parent=15 // pred_region
          %s318 = sand.u32 %s24, 1
          %s319 = scalar_lea.sflag [#allocation9], %s318
          %s320 = sand.u32 %s132, 1
          %s321 = smul.addr %s320, 32
          %s322 = scalar_lea.vmem [#allocation8], %s321
          %s323 = sadd.s32 %s31, %s32
          %s324 = smul.u32 4, %s323
          %s326 = ssub.s32 512, 512
          %327 = vsyncadd %s319, %s326
          %s328 = smul.addr %s324, 128
          %s329 = scalar_lea.hbm %s3, %s328
          %s330 = sshll.u32 %s322, 4
          %s331 = int_to_ptr.vmem [resolvable:$true] %s330
          %336 = dma.hbm_to_vmem [thread:$0]  %s329, 512, %s331, %s319, 128, 128, 8
        $region32: #{tpu_custom_call.1} parent=15 // pred_fallthru
          _
        // Predicated region
        $region33: #{tpu_custom_call.1} parent=15 // pred_check
          %p337 = pneg %p170
        $region34: #{tpu_custom_call.1} parent=15 // pred_check_branch
          %339 = sbr.rel (%p337) target = $region36
        $region35: #{tpu_custom_call.1} parent=15 // pred_region
          %s340 = sand.u32 %s24, 1
          %s341 = scalar_lea.sflag [#allocation9], %s340
          %s342 = sand.u32 %s160, 1
          %s343 = smul.addr %s342, 32
          %s344 = scalar_lea.vmem [#allocation10], %s343
          %s345 = sadd.s32 %s31, %s32
          %s346 = smul.u32 4, %s345
          %s348 = ssub.s32 512, 512
          %349 = vsyncadd %s341, %s348
          %s350 = smul.addr %s346, 128
          %s351 = scalar_lea.hbm %s4, %s350
          %s352 = sshll.u32 %s344, 4
          %s353 = int_to_ptr.vmem [resolvable:$true] %s352
          %358 = dma.hbm_to_vmem [thread:$0]  %s351, 512, %s353, %s341, 128, 128, 8
        $region36: #{tpu_custom_call.1} parent=15 // pred_fallthru
          _
        // Predicated region
        $region37: #{tpu_custom_call.1} parent=15 // pred_check
          %p359 = pneg %p198
        $region38: #{tpu_custom_call.1} parent=15 // pred_check_branch
          %361 = sbr.rel (%p359) target = $region40
        $region39: #{tpu_custom_call.1} parent=15 // pred_region
          %s362 = sadd.s32 %s31, %s32
          %p363 = scmp.lt.s32.totalorder %s362, 1
          %s364 = scalar_select %p363, %s362, 1
          %s365 = smul.addr %s364, 8
          %s366 = scalar_lea.vmem %s5, %s365
          %s367 = sadd.s32 %s31, %s32
        $region40: #{tpu_custom_call.1} parent=15 // pred_fallthru
          _
      $region16: #{tpu_custom_call.1} parent=5 // pred_fallthru
        _
      %p368 = scmp.le.s32.totalorder 1, %s24
      %p369 = scmp.lt.s32.totalorder %s24, 3
      %p370 = pnand %p368, %p369
      %p371 = pneg %p370
      // Predicated region
      $region41: #{tpu_custom_call.1} parent=5 // pred_check
        _
      $region42: #{tpu_custom_call.1} parent=5 // pred_check_branch
        %373 = sbr.rel (%p370) target = $region44
      $region43: #{tpu_custom_call.1} parent=5 // pred_region
        %s374 = ssub.s32 %s24, 1
        %s375 = sand.u32 %s51, 1
        %s376 = scalar_lea.sflag [#allocation3], %s375
        %s377 = sand.u32 %s51, 1
        %s378 = smul.addr %s377, 32
        %s379 = scalar_lea.vmem [#allocation2], %s378
        // Predicated region
        $region45: #{tpu_custom_call.1} parent=43 // pred_check
          %p380 = pneg %p64
        $region46: #{tpu_custom_call.1} parent=43 // pred_check_branch
          %382 = sbr.rel (%p380) target = $region48
        $region47: #{tpu_custom_call.1} parent=43 // pred_region
          %383 = dma.done %s376, 512
        $region48: #{tpu_custom_call.1} parent=43 // pred_fallthru
          _
        %s384 = sand.u32 %s29, 1
        %s385 = scalar_lea.sflag [#allocation6], %s384
        %s386 = sand.u32 %s79, 1
        %s387 = smul.addr %s386, 32
        %s388 = scalar_lea.vmem [#allocation5], %s387
        // Predicated region
        $region49: #{tpu_custom_call.1} parent=43 // pred_check
          %p389 = pneg %p92
        $region50: #{tpu_custom_call.1} parent=43 // pred_check_branch
          %391 = sbr.rel (%p389) target = $region52
        $region51: #{tpu_custom_call.1} parent=43 // pred_region
          %392 = dma.done %s385, 512
        $region52: #{tpu_custom_call.1} parent=43 // pred_fallthru
          _
        %s393 = sand.u32 %s29, 1
        %s394 = scalar_lea.sflag [#allocation6], %s393
        %s395 = sand.u32 %s107, 1
        %s396 = smul.addr %s395, 32
        %s397 = scalar_lea.vmem [#allocation7], %s396
        // Predicated region
        $region53: #{tpu_custom_call.1} parent=43 // pred_check
          %p398 = pneg %p120
        $region54: #{tpu_custom_call.1} parent=43 // pred_check_branch
          %400 = sbr.rel (%p398) target = $region56
        $region55: #{tpu_custom_call.1} parent=43 // pred_region
          %401 = dma.done %s394, 512
        $region56: #{tpu_custom_call.1} parent=43 // pred_fallthru
          _
        %s402 = sand.u32 %s29, 1
        %s403 = scalar_lea.sflag [#allocation9], %s402
        %s404 = sand.u32 %s135, 1
        %s405 = smul.addr %s404, 32
        %s406 = scalar_lea.vmem [#allocation8], %s405
        // Predicated region
        $region57: #{tpu_custom_call.1} parent=43 // pred_check
          %p407 = pneg %p148
        $region58: #{tpu_custom_call.1} parent=43 // pred_check_branch
          %409 = sbr.rel (%p407) target = $region60
        $region59: #{tpu_custom_call.1} parent=43 // pred_region
          %410 = dma.done %s403, 512
        $region60: #{tpu_custom_call.1} parent=43 // pred_fallthru
          _
        %s411 = sand.u32 %s29, 1
        %s412 = scalar_lea.sflag [#allocation9], %s411
        %s413 = sand.u32 %s163, 1
        %s414 = smul.addr %s413, 32
        %s415 = scalar_lea.vmem [#allocation10], %s414
        // Predicated region
        $region61: #{tpu_custom_call.1} parent=43 // pred_check
          %p416 = pneg %p176
        $region62: #{tpu_custom_call.1} parent=43 // pred_check_branch
          %418 = sbr.rel (%p416) target = $region64
        $region63: #{tpu_custom_call.1} parent=43 // pred_region
          %419 = dma.done %s412, 512
        $region64: #{tpu_custom_call.1} parent=43 // pred_fallthru
          _
        %s420 = sand.u32 %s51, 1
        %s421 = scalar_lea.sflag [#allocation3], %s420
        %s422 = sand.u32 %s51, 1
        %s423 = smul.addr %s422, 32
        %s424 = scalar_lea.vmem [#allocation2], %s423
        %p425 = pneg %p64
        %p426 = pneg %p61
        %s427 = sand.u32 %s29, 1
        %s428 = scalar_lea.sflag [#allocation6], %s427
        %s429 = sand.u32 %s79, 1
        %s430 = smul.addr %s429, 32
        %s431 = scalar_lea.vmem [#allocation5], %s430
        %p432 = pneg %p92
        %p433 = pneg %p89
        %s434 = sand.u32 %s29, 1
        %s435 = scalar_lea.sflag [#allocation6], %s434
        %s436 = sand.u32 %s107, 1
        %s437 = smul.addr %s436, 32
        %s438 = scalar_lea.vmem [#allocation7], %s437
        %p439 = pneg %p120
        %p440 = pneg %p117
        %s441 = sand.u32 %s29, 1
        %s442 = scalar_lea.sflag [#allocation9], %s441
        %s443 = sand.u32 %s135, 1
        %s444 = smul.addr %s443, 32
        %s445 = scalar_lea.vmem [#allocation8], %s444
        %p446 = pneg %p148
        %p447 = pneg %p145
        %s448 = sand.u32 %s29, 1
        %s449 = scalar_lea.sflag [#allocation9], %s448
        %s450 = sand.u32 %s163, 1
        %s451 = smul.addr %s450, 32
        %s452 = scalar_lea.vmem [#allocation10], %s451
        %p453 = pneg %p176
        %p454 = pneg %p173
        %s455 = sadd.s32 %s33, %s34
        %p456 = scmp.lt.s32.totalorder %s455, 1
        %s457 = scalar_select %p456, %s455, 1
        %s458 = smul.addr %s457, 8
        %s459 = scalar_lea.vmem %s5, %s458
        %p460 = pneg %p204
        %p461 = pneg %p201
        %p462 = pneg %p230
        %p463 = pneg %p227
        %s464 = sand.u32 %s217, 1
        %s465 = scalar_lea.sflag [#allocation4], %s464
        %s466 = sand.u32 %s217, 1
        %s467 = smul.addr %s466, 104
        %s468 = scalar_lea.vmem [#allocation11], %s467
        %s469 = sadd.s32 %s33, %s34
        %s470 = smul.u32 4, %s469
        %s471 = sadd.s32 %s33, %s34
        %s472 = smul.u32 4, %s471
        %s473 = sadd.s32 %s33, %s34
        %s474 = smul.u32 4, %s473
        %s475 = sadd.s32 %s33, %s34
        %s476 = smul.u32 4, %s475
        %s477 = sadd.s32 %s33, %s34
        %s478 = smul.u32 4, %s477
        %s479 = sadd.s32 %s33, %s34
        %p480 = scmp.lt.s32.totalorder %s479, 1
        %s481 = scalar_select %p480, %s479, 1
        %s482 = smul.addr %s481, 8
        %s483 = scalar_lea.vmem %s5, %s482
        %s484 = sadd.s32 %s33, %s34
        %p485 = scmp.eq.s32.totalorder %s34, 0
        // Predicated region
        $region65: #{tpu_custom_call.1} parent=43 // pred_check
          %p486 = pneg %p485
        $region66: #{tpu_custom_call.1} parent=43 // pred_check_branch
          %488 = sbr.rel (%p486) target = $region68
        $region67: #{tpu_custom_call.1} parent=43 // pred_region
          %489 = vst [vmem:[%s468] sm:$0xff] 0.0
          %490 = vst [vmem:[%s468 + $0x8] sm:$0xff] 0.0
          %491 = vst [vmem:[%s468 + $0x10] sm:$0xff] 0.0
          %492 = vst [vmem:[%s468 + $0x18] sm:$0xff] 0.0
          %493 = vst [vmem:[%s468 + $0x20] sm:$0xff] 0.0
          %494 = vst [vmem:[%s468 + $0x28] sm:$0xff] 0.0
          %495 = vst [vmem:[%s468 + $0x30] sm:$0xff] 0.0
          %496 = vst [vmem:[%s468 + $0x38] sm:$0xff] 0.0
          %497 = vst [vmem:[%s468 + $0x40] sm:$0xff] 0.0
          %498 = vst [vmem:[%s468 + $0x48] sm:$0xff] 0.0
          %499 = vst [vmem:[%s468 + $0x50] sm:$0xff] 0.0
          %500 = vst [vmem:[%s468 + $0x58] sm:$0xff] 0.0
          %501 = vst [vmem:[%s468 + $0x60] sm:$0xff] 0.0
        $region68: #{tpu_custom_call.1} parent=43 // pred_fallthru
          _
        %v502 = vld [vmem:[%s379] sm:$0xff]
        %v503 = vld [vmem:[%s379 + $0x8] sm:$0xff]
        %v504 = vld [vmem:[%s379 + $0x10] sm:$0xff]
        %v505 = vld [vmem:[%s379 + $0x18] sm:$0xff]
        %vm506 = vcmp.gt.f32.partialorder %v502, 0.0
        %vm507 = vcmp.gt.f32.partialorder %v503, 0.0
        %vm508 = vcmp.gt.f32.partialorder %v504, 0.0
        %vm509 = vcmp.gt.f32.partialorder %v505, 0.0
        %v510 = vsel %vm506, 1, 0
        %v511 = vsel %vm507, 1, 0
        %v512 = vsel %vm508, 1, 0
        %v513 = vsel %vm509, 1, 0
        %v514 = vcvt.s32.f32 %v510
        %v515 = vcvt.s32.f32 %v511
        %v516 = vcvt.s32.f32 %v512
        %v517 = vcvt.s32.f32 %v513
        %v518 = vld [vmem:[%s388] sm:$0xff]
        %v519 = vld [vmem:[%s388 + $0x8] sm:$0xff]
        %v520 = vld [vmem:[%s388 + $0x10] sm:$0xff]
        %v521 = vld [vmem:[%s388 + $0x18] sm:$0xff]
        %v522 = vld [vmem:[%s397] sm:$0xff]
        %v523 = vld [vmem:[%s397 + $0x8] sm:$0xff]
        %v524 = vld [vmem:[%s397 + $0x10] sm:$0xff]
        %v525 = vld [vmem:[%s397 + $0x18] sm:$0xff]
        %v526 = vld [vmem:[%s406] sm:$0xff]
        %v527 = vld [vmem:[%s406 + $0x8] sm:$0xff]
        %v528 = vld [vmem:[%s406 + $0x10] sm:$0xff]
        %v529 = vld [vmem:[%s406 + $0x18] sm:$0xff]
        %v530 = vld [vmem:[%s415] sm:$0xff]
        %v531 = vld [vmem:[%s415 + $0x8] sm:$0xff]
        %v532 = vld [vmem:[%s415 + $0x10] sm:$0xff]
        %v533 = vld [vmem:[%s415 + $0x18] sm:$0xff]
        %v534 = vld [vmem:[%s483] sm:$0xff]
        %v535 = vunpack.c.0.s8 %v534
        %v536 = vunpack.c.1.s8 %v534
        %v537 = vunpack.c.2.s8 %v534
        %v538 = vunpack.c.3.s8 %v534
        %v539 = vcvt.s32.f32 %v535
        %v540 = vcvt.s32.f32 %v536
        %v541 = vcvt.s32.f32 %v537
        %v542 = vcvt.s32.f32 %v538
        %v543 = vadd.f32 %v518, 1e-06
        %v544 = vadd.f32 %v519, 1e-06
        %v545 = vadd.f32 %v520, 1e-06
        %v546 = vadd.f32 %v521, 1e-06
        %v547 = vlog2.pop %v543
        %v548 = vmul.f32 %v547, 0.6931472
        %v549 = vlog2.pop %v544
        %v550 = vmul.f32 %v549, 0.6931472
        %v551 = vlog2.pop %v545
        %v552 = vmul.f32 %v551, 0.6931472
        %v553 = vlog2.pop %v546
        %v554 = vmul.f32 %v553, 0.6931472
        %v555 = vsub.f32 0.0, %v548
        %v556 = vsub.f32 0.0, %v550
        %v557 = vsub.f32 0.0, %v552
        %v558 = vsub.f32 0.0, %v554
        %v559 = vsub.f32 %v522, %v502
        %v560 = vsub.f32 %v523, %v503
        %v561 = vsub.f32 %v524, %v504
        %v562 = vsub.f32 %v525, %v505
        %v563 = vand.u32 2147483647, %v559
        %v564 = vand.u32 2147483647, %v560
        %v565 = vand.u32 2147483647, %v561
        %v566 = vand.u32 2147483647, %v562
        %vm567 = vcmp.lt.f32.partialorder %v563, 1.0
        %vm568 = vcmp.lt.f32.partialorder %v564, 1.0
        %vm569 = vcmp.lt.f32.partialorder %v565, 1.0
        %vm570 = vcmp.lt.f32.partialorder %v566, 1.0
        %v571 = vmul.f32 %v563, 0.5
        %v572 = vmul.f32 %v564, 0.5
        %v573 = vmul.f32 %v565, 0.5
        %v574 = vmul.f32 %v566, 0.5
        %v575 = vmul.f32 %v571, %v563
        %v576 = vmul.f32 %v572, %v564
        %v577 = vmul.f32 %v573, %v565
        %v578 = vmul.f32 %v574, %v566
        %v579 = vsub.f32 %v563, 0.5
        %v580 = vsub.f32 %v564, 0.5
        %v581 = vsub.f32 %v565, 0.5
        %v582 = vsub.f32 %v566, 0.5
        %v583 = vsel %vm567, %v575, %v579
        %v584 = vsel %vm568, %v576, %v580
        %v585 = vsel %vm569, %v577, %v581
        %v586 = vsel %vm570, %v578, %v582
        %v587 = vsub.f32 %v526, %v502
        %v588 = vsub.f32 %v527, %v503
        %v589 = vsub.f32 %v528, %v504
        %v590 = vsub.f32 %v529, %v505
        %v591 = vand.u32 2147483647, %v587
        %v592 = vand.u32 2147483647, %v588
        %v593 = vand.u32 2147483647, %v589
        %v594 = vand.u32 2147483647, %v590
        %vm595 = vcmp.lt.f32.partialorder %v591, 1.0
        %vm596 = vcmp.lt.f32.partialorder %v592, 1.0
        %vm597 = vcmp.lt.f32.partialorder %v593, 1.0
        %vm598 = vcmp.lt.f32.partialorder %v594, 1.0
        %v599 = vmul.f32 %v591, 0.5
        %v600 = vmul.f32 %v592, 0.5
        %v601 = vmul.f32 %v593, 0.5
        %v602 = vmul.f32 %v594, 0.5
        %v603 = vmul.f32 %v599, %v591
        %v604 = vmul.f32 %v600, %v592
        %v605 = vmul.f32 %v601, %v593
        %v606 = vmul.f32 %v602, %v594
        %v607 = vsub.f32 %v591, 0.5
        %v608 = vsub.f32 %v592, 0.5
        %v609 = vsub.f32 %v593, 0.5
        %v610 = vsub.f32 %v594, 0.5
        %v611 = vsel %vm595, %v603, %v607
        %v612 = vsel %vm596, %v604, %v608
        %v613 = vsel %vm597, %v605, %v609
        %v614 = vsel %vm598, %v606, %v610
        %v615 = vadd.f32 %v530, 1e-06
        %v616 = vadd.f32 %v531, 1e-06
        %v617 = vadd.f32 %v532, 1e-06
        %v618 = vadd.f32 %v533, 1e-06
        %v619 = vlog2.pop %v615
        %v620 = vmul.f32 %v619, 0.6931472
        %v621 = vlog2.pop %v616
        %v622 = vmul.f32 %v621, 0.6931472
        %v623 = vlog2.pop %v617
        %v624 = vmul.f32 %v623, 0.6931472
        %v625 = vlog2.pop %v618
        %v626 = vmul.f32 %v625, 0.6931472
        %v627 = vsub.f32 0.0, %v620
        %v628 = vsub.f32 0.0, %v622
        %v629 = vsub.f32 0.0, %v624
        %v630 = vsub.f32 0.0, %v626
        %v631 = vsub.f32 1.0, %v530
        %v632 = vsub.f32 1.0, %v531
        %v633 = vsub.f32 1.0, %v532
        %v634 = vsub.f32 1.0, %v533
        %v635 = vadd.f32 %v631, 1e-06
        %v636 = vadd.f32 %v632, 1e-06
        %v637 = vadd.f32 %v633, 1e-06
        %v638 = vadd.f32 %v634, 1e-06
        %v639 = vlog2.pop %v635
        %v640 = vmul.f32 %v639, 0.6931472
        %v641 = vlog2.pop %v636
        %v642 = vmul.f32 %v641, 0.6931472
        %v643 = vlog2.pop %v637
        %v644 = vmul.f32 %v643, 0.6931472
        %v645 = vlog2.pop %v638
        %v646 = vmul.f32 %v645, 0.6931472
        %v647 = vsub.f32 0.0, %v640
        %v648 = vsub.f32 0.0, %v642
        %v649 = vsub.f32 0.0, %v644
        %v650 = vsub.f32 0.0, %v646
        %vm651 = vcmp.gt.f32.partialorder %v530, 0.5
        %vm652 = vcmp.gt.f32.partialorder %v531, 0.5
        %vm653 = vcmp.gt.f32.partialorder %v532, 0.5
        %vm654 = vcmp.gt.f32.partialorder %v533, 0.5
        %v655 = vsel %vm651, 1, 0
        %v656 = vsel %vm652, 1, 0
        %v657 = vsel %vm653, 1, 0
        %v658 = vsel %vm654, 1, 0
        %v659 = vcvt.s32.f32 %v655
        %v660 = vcvt.s32.f32 %v656
        %v661 = vcvt.s32.f32 %v657
        %v662 = vcvt.s32.f32 %v658
        %v663 = vsub.f32 1.0, %v659
        %v664 = vsub.f32 1.0, %v660
        %v665 = vsub.f32 1.0, %v661
        %v666 = vsub.f32 1.0, %v662
        %vm667 = vcmp.gt.f32.partialorder %v591, 3.0
        %vm668 = vcmp.gt.f32.partialorder %v592, 3.0
        %vm669 = vcmp.gt.f32.partialorder %v593, 3.0
        %vm670 = vcmp.gt.f32.partialorder %v594, 3.0
        %v671 = vsel %vm667, 1, 0
        %v672 = vsel %vm668, 1, 0
        %v673 = vsel %vm669, 1, 0
        %v674 = vsel %vm670, 1, 0
        %v675 = vcvt.s32.f32 %v671
        %v676 = vcvt.s32.f32 %v672
        %v677 = vcvt.s32.f32 %v673
        %v678 = vcvt.s32.f32 %v674
        %v679 = vmul.f32 %v514, %v555
        %v680 = vmul.f32 %v515, %v556
        %v681 = vmul.f32 %v516, %v557
        %v682 = vmul.f32 %v517, %v558
        %v683 = vmul.f32 %v514, %v583
        %v684 = vmul.f32 %v515, %v584
        %v685 = vmul.f32 %v516, %v585
        %v686 = vmul.f32 %v517, %v586
        %v687 = vmul.f32 %v514, %v611
        %v688 = vmul.f32 %v515, %v612
        %v689 = vmul.f32 %v516, %v613
        %v690 = vmul.f32 %v517, %v614
        %v691 = vmul.f32 %v539, %v627
        %v692 = vmul.f32 %v540, %v628
        %v693 = vmul.f32 %v541, %v629
        %v694 = vmul.f32 %v542, %v630
        %v695 = vmul.f32 %v514, %v647
        %v696 = vmul.f32 %v515, %v648
        %v697 = vmul.f32 %v516, %v649
        %v698 = vmul.f32 %v517, %v650
        %v699 = vmul.f32 %v514, %v675
        %v700 = vmul.f32 %v515, %v676
        %v701 = vmul.f32 %v516, %v677
        %v702 = vmul.f32 %v517, %v678
        %v703 = vmul.f32 %v514, %v591
        %v704 = vmul.f32 %v515, %v592
        %v705 = vmul.f32 %v516, %v593
        %v706 = vmul.f32 %v517, %v594
        %v707 = vmul.f32 %v659, %v539
        %v708 = vmul.f32 %v660, %v540
        %v709 = vmul.f32 %v661, %v541
        %v710 = vmul.f32 %v662, %v542
        %v711 = vmul.f32 %v659, %v514
        %v712 = vmul.f32 %v660, %v515
        %v713 = vmul.f32 %v661, %v516
        %v714 = vmul.f32 %v662, %v517
        %v715 = vmax.f32 %v711, %v539
        %v716 = vmax.f32 %v712, %v540
        %v717 = vmax.f32 %v713, %v541
        %v718 = vmax.f32 %v714, %v542
        %v719 = vmul.f32 %v663, %v514
        %v720 = vmul.f32 %v664, %v515
        %v721 = vmul.f32 %v665, %v516
        %v722 = vmul.f32 %v666, %v517
        %v723 = vmul.f32 %v663, %v539
        %v724 = vmul.f32 %v664, %v540
        %v725 = vmul.f32 %v665, %v541
        %v726 = vmul.f32 %v666, %v542
        %v727 = vmax.f32 %v723, %v514
        %v728 = vmax.f32 %v724, %v515
        %v729 = vmax.f32 %v725, %v516
        %v730 = vmax.f32 %v726, %v517
        %v731 = vld [vmem:[%s468] sm:$0xff]
        %v732 = vadd.f32 %v514, %v515
        %v733 = vadd.f32 %v732, %v516
        %v734 = vadd.f32 %v733, %v517
        %v735 = vadd.f32 %v731, %v734
        %736 = vst [vmem:[%s468] sm:$0xff] %v735
        %s737 = scalar_lea.vmem %s468, 8 [#allocation11]
        %v738 = vld [vmem:[%s737] sm:$0xff]
        %v739 = vadd.f32 %v679, %v680
        %v740 = vadd.f32 %v739, %v681
        %v741 = vadd.f32 %v740, %v682
        %v742 = vadd.f32 %v738, %v741
        %743 = vst [vmem:[%s737] sm:$0xff] %v742
        %s744 = scalar_lea.vmem %s468, 16 [#allocation11]
        %v745 = vld [vmem:[%s744] sm:$0xff]
        %v746 = vadd.f32 %v683, %v684
        %v747 = vadd.f32 %v746, %v685
        %v748 = vadd.f32 %v747, %v686
        %v749 = vadd.f32 %v745, %v748
        %750 = vst [vmem:[%s744] sm:$0xff] %v749
        %s751 = scalar_lea.vmem %s468, 24 [#allocation11]
        %v752 = vld [vmem:[%s751] sm:$0xff]
        %v753 = vadd.f32 %v687, %v688
        %v754 = vadd.f32 %v753, %v689
        %v755 = vadd.f32 %v754, %v690
        %v756 = vadd.f32 %v752, %v755
        %757 = vst [vmem:[%s751] sm:$0xff] %v756
        %s758 = scalar_lea.vmem %s468, 32 [#allocation11]
        %v759 = vld [vmem:[%s758] sm:$0xff]
        %v760 = vadd.f32 %v691, %v692
        %v761 = vadd.f32 %v760, %v693
        %v762 = vadd.f32 %v761, %v694
        %v763 = vadd.f32 %v759, %v762
        %764 = vst [vmem:[%s758] sm:$0xff] %v763
        %s765 = scalar_lea.vmem %s468, 40 [#allocation11]
        %v766 = vld [vmem:[%s765] sm:$0xff]
        %v767 = vadd.f32 %v695, %v696
        %v768 = vadd.f32 %v767, %v697
        %v769 = vadd.f32 %v768, %v698
        %v770 = vadd.f32 %v766, %v769
        %771 = vst [vmem:[%s765] sm:$0xff] %v770
        %s772 = scalar_lea.vmem %s468, 48 [#allocation11]
        %v773 = vld [vmem:[%s772] sm:$0xff]
        %v774 = vadd.f32 %v539, %v540
        %v775 = vadd.f32 %v774, %v541
        %v776 = vadd.f32 %v775, %v542
        %v777 = vadd.f32 %v773, %v776
        %778 = vst [vmem:[%s772] sm:$0xff] %v777
        %s779 = scalar_lea.vmem %s468, 56 [#allocation11]
        %v780 = vld [vmem:[%s779] sm:$0xff]
        %v781 = vadd.f32 %v699, %v700
        %v782 = vadd.f32 %v781, %v701
        %v783 = vadd.f32 %v782, %v702
        %v784 = vadd.f32 %v780, %v783
        %785 = vst [vmem:[%s779] sm:$0xff] %v784
        %s786 = scalar_lea.vmem %s468, 64 [#allocation11]
        %v787 = vld [vmem:[%s786] sm:$0xff]
        %v788 = vadd.f32 %v703, %v704
        %v789 = vadd.f32 %v788, %v705
        %v790 = vadd.f32 %v789, %v706
        %v791 = vadd.f32 %v787, %v790
        %792 = vst [vmem:[%s786] sm:$0xff] %v791
        %s793 = scalar_lea.vmem %s468, 72 [#allocation11]
        %v794 = vld [vmem:[%s793] sm:$0xff]
        %v795 = vadd.f32 %v707, %v708
        %v796 = vadd.f32 %v795, %v709
        %v797 = vadd.f32 %v796, %v710
        %v798 = vadd.f32 %v794, %v797
        %799 = vst [vmem:[%s793] sm:$0xff] %v798
        %s800 = scalar_lea.vmem %s468, 80 [#allocation11]
        %v801 = vld [vmem:[%s800] sm:$0xff]
        %v802 = vadd.f32 %v715, %v716
        %v803 = vadd.f32 %v802, %v717
        %v804 = vadd.f32 %v803, %v718
        %v805 = vadd.f32 %v801, %v804
        %806 = vst [vmem:[%s800] sm:$0xff] %v805
        %s807 = scalar_lea.vmem %s468, 88 [#allocation11]
        %v808 = vld [vmem:[%s807] sm:$0xff]
        %v809 = vadd.f32 %v719, %v720
        %v810 = vadd.f32 %v809, %v721
        %v811 = vadd.f32 %v810, %v722
        %v812 = vadd.f32 %v808, %v811
        %813 = vst [vmem:[%s807] sm:$0xff] %v812
        %s814 = scalar_lea.vmem %s468, 96 [#allocation11]
        %v815 = vld [vmem:[%s814] sm:$0xff]
        %v816 = vadd.f32 %v727, %v728
        %v817 = vadd.f32 %v816, %v729
        %v818 = vadd.f32 %v817, %v730
        %v819 = vadd.f32 %v815, %v818
        %820 = vst [vmem:[%s814] sm:$0xff] %v819
        %s821 = sand.u32 %s217, 1
        %s822 = scalar_lea.sflag [#allocation4], %s821
        %s823 = sand.u32 %s217, 1
        %s824 = smul.addr %s823, 104
        %s825 = scalar_lea.vmem [#allocation11], %s824
        // Predicated region
        $region69: #{tpu_custom_call.1} parent=43 // pred_check
          %p826 = pneg %p227
        $region70: #{tpu_custom_call.1} parent=43 // pred_check_branch
          %828 = sbr.rel (%p826) target = $region72
        $region71: #{tpu_custom_call.1} parent=43 // pred_region
          %s830 = ssub.s32 1664, 1664
          %831 = vsyncadd %s822, %s830
          %s832 = smul.addr %s33, 13
          %s833 = smul.addr %s832, 128
          %s834 = scalar_lea.hbm %s6, %s833
          %s835 = sshll.u32 %s825, 4
          %s836 = int_to_ptr.vmem [resolvable:$true] %s835
          %841 = dma.vmem_to_hbm [thread:$0]  %s836, 1664, %s834, %s822, 128, 128, 8
        $region72: #{tpu_custom_call.1} parent=43 // pred_fallthru
          _
      $region44: #{tpu_custom_call.1} parent=5 // pred_fallthru
        _
      %p842 = scmp.le.s32.totalorder 2, %s24
      // Predicated region
      $region73: #{tpu_custom_call.1} parent=5 // pred_check
        %p843 = pneg %p842
      $region74: #{tpu_custom_call.1} parent=5 // pred_check_branch
        %845 = sbr.rel (%p843) target = $region76
      $region75: #{tpu_custom_call.1} parent=5 // pred_region
        %s846 = ssub.s32 %s24, 2
        // Predicated region
        $region77: #{tpu_custom_call.1} parent=75 // pred_check
          %p847 = pneg %p233
        $region78: #{tpu_custom_call.1} parent=75 // pred_check_branch
          %849 = sbr.rel (%p847) target = $region80
        $region79: #{tpu_custom_call.1} parent=75 // pred_region
          %s850 = sand.u32 %s218, 1
          %s851 = scalar_lea.sflag [#allocation4], %s850
          %s852 = sand.u32 %s218, 1
          %s853 = smul.addr %s852, 104
          %s854 = scalar_lea.vmem [#allocation11], %s853
          %855 = dma.done %s851, 1664
        $region80: #{tpu_custom_call.1} parent=75 // pred_fallthru
          _
      $region76: #{tpu_custom_call.1} parent=5 // pred_fallthru
        _
    $region6: #{tpu_custom_call.1} parent=1 // loop_footer
      %s28 = sadd.s32 1, %s24
    $region7: #{tpu_custom_call.1} parent=1 // loop_footer_branch
      %23 = sbr.rel target = $region3
    $region8: #{tpu_custom_call.1} parent=1 // loop_exit
      _
    %856 = vsyncpa [#allocation3], 1
    %s857 = scalar_lea.sflag [#allocation3], 1
    %858 = vsyncpa %s857, 1
    %859 = vsyncpa [#allocation6], 1
    %s860 = scalar_lea.sflag [#allocation6], 1
    %861 = vsyncpa %s860, 1
    %862 = vsyncpa [#allocation9], 1
    %s863 = scalar_lea.sflag [#allocation9], 1
    %864 = vsyncpa %s863, 1
    %865 = vsyncpa [#allocation4], 1
    %s866 = scalar_lea.sflag [#allocation4], 1
    %867 = vsyncpa %s866, 1

</llo_original>
